<compile_context>
chip_gen: v7x
topology: tpu7x:2x2x1
jax: 0.10.0
libtpu: 0.0.40
codegen_flags: <defaults>
</compile_context>

<pallas_src>
import functools

import jax
import jax.numpy as jnp
from jax.experimental import pallas as pl
from jax.experimental.pallas import tpu as pltpu


_NEG_PAD = -1e30   # bias for padded class lanes -> exp() underflows to exactly 0
_MAX_TM = 512      # max rows per grid step


def _round_up(x, m):
    return ((x + m - 1) // m) * m


def _nbytes(a):
    return a.size * a.dtype.itemsize


def _tensorcores_per_chip():
    """How many TensorCores one device exposes (megacore => grid should be >= 2)."""
    try:
        kind = jax.devices()[0].device_kind.lower()
    except Exception:
        return 1
    return 2 if ("v4" in kind or "v5p" in kind or "v7" in kind) else 1


def _vmem_cap_bytes():
    try:
        cap = int(pltpu.get_tpu_info().vmem_capacity_bytes)
        if cap > 0:
            return cap
    except Exception:
        pass
    return 64 * 2 ** 20   # conservative (v7x per-TC capacity)


def _pick_row_tile(n, n_cores):
    """Row tile: one big tile on single-TC chips, >= n_cores grid steps on megacore."""
    n_al = _round_up(max(n, 1), 16)
    if n_cores > 1:
        per_core = -(-n_al // n_cores)          # ceil
        tm = _round_up(per_core, 16)
    else:
        tm = n_al
    return max(16, min(_MAX_TM, tm))


# ----------------------------------------------------------------------------- kernel
def mlp_kernel(x_ref, w1_ref, b1_ref, w2_ref, b2_ref, o_ref, *acc_scratch,
               hidden_chunk, num_chunks):
    # x_ref:  (tm, in_dim)        f32  (streamed row tile; cast to bf16 here, on the VPU)
    # w1_ref: (in_dim, hidden)    bf16 (resident)
    # b1_ref: (1, hidden)         f32  (resident)
    # w2_ref: (hidden, out_pad)   bf16 (resident, zero-padded class columns)
    # b2_ref: (1, out_pad)        f32  (resident, padded class lanes = -1e30)
    # o_ref:  (tm, out_pad)       f32  (lane-dense output tile)
    # acc_scratch: optional VMEM (tm, out_pad) f32 accumulator (only when num_chunks > 1)
    x = x_ref[...].astype(jnp.bfloat16)

    if num_chunks == 1:
        h = jnp.dot(x, w1_ref[...], preferred_element_type=jnp.float32)
        h = jnp.maximum(h + b1_ref[...], 0.0)          # bias + ReLU in f32
        # dropout: identity in eval mode -> omitted
        y = jnp.dot(h.astype(jnp.bfloat16), w2_ref[...],
                    preferred_element_type=jnp.float32)
    else:
        acc_ref, = acc_scratch
        for c in range(num_chunks):                    # static unroll over hidden chunks
            lo = c * hidden_chunk
            hi = lo + hidden_chunk
            h = jnp.dot(x, w1_ref[:, lo:hi], preferred_element_type=jnp.float32)
            h = jnp.maximum(h + b1_ref[:, lo:hi], 0.0)
            part = jnp.dot(h.astype(jnp.bfloat16), w2_ref[lo:hi, :],
                           preferred_element_type=jnp.float32)
            if c == 0:
                acc_ref[...] = part                    # no zero-init pass
            else:
                acc_ref[...] += part
        y = acc_ref[...]

    y = y + b2_ref[...]                                # padded class lanes -> ~-1e30

    # Numerically-stable log_softmax over the class axis (f32 epilogue).
    m = jnp.max(y, axis=-1, keepdims=True)
    s = y - m
    lse = jnp.log(jnp.sum(jnp.exp(s), axis=-1, keepdims=True))
    o_ref[...] = (s - lse).astype(o_ref.dtype)


# ----------------------------------------------------------------------------- wrapper
@functools.partial(jax.jit, static_argnames=("tm", "hidden_chunk", "out_dim"))
def _mlp_forward_impl(x, w1b, b1f, w2b, b2f, *, tm, hidden_chunk, out_dim):
    N, in_dim = x.shape
    hidden_dim = w1b.shape[1]
    out_pad = w2b.shape[1]
    num_chunks = hidden_dim // hidden_chunk

    grid = (pl.cdiv(N, tm),)

    # VMEM budget: weights (default double-buffered, but fetched once) + streamed tiles.
    weight_bytes = _nbytes(w1b) + _nbytes(w2b) + _nbytes(b1f) + _nbytes(b2f)
    stream_bytes = 2 * (tm * in_dim * x.dtype.itemsize + tm * out_pad * 4)
    acc_bytes = tm * out_pad * 4 if num_chunks > 1 else 0
    needed = 2 * weight_bytes + stream_bytes + acc_bytes
    vmem_limit = int(min(0.75 * _vmem_cap_bytes(), max(1.5 * needed, 4 * 2 ** 20)))

    cost = pl.CostEstimate(
        flops=int(2 * N * (in_dim * hidden_dim + hidden_dim * out_pad)),
        transcendentals=int(N * out_pad),
        bytes_accessed=int(_nbytes(x) + weight_bytes + N * out_pad * 4),
    )

    scratch_shapes = ()
    if num_chunks > 1:
        scratch_shapes = (pltpu.VMEM((tm, out_pad), jnp.float32),)

    out = pl.pallas_call(
        functools.partial(mlp_kernel, hidden_chunk=hidden_chunk, num_chunks=num_chunks),
        out_shape=jax.ShapeDtypeStruct((N, out_pad), jnp.float32),
        grid_spec=pltpu.PrefetchScalarGridSpec(
            num_scalar_prefetch=0,
            grid=grid,
            in_specs=[
                pl.BlockSpec((tm, in_dim), lambda i: (i, 0)),            # streamed x rows
                pl.BlockSpec((in_dim, hidden_dim), lambda i: (0, 0)),    # resident W1
                pl.BlockSpec((1, hidden_dim), lambda i: (0, 0)),         # resident b1
                pl.BlockSpec((hidden_dim, out_pad), lambda i: (0, 0)),   # resident W2
                pl.BlockSpec((1, out_pad), lambda i: (0, 0)),            # resident b2
            ],
            out_specs=pl.BlockSpec((tm, out_pad), lambda i: (i, 0)),
            scratch_shapes=scratch_shapes,
        ),
        compiler_params=pltpu.CompilerParams(
            dimension_semantics=("parallel",),
            vmem_limit_bytes=vmem_limit,
        ),
        cost_estimate=cost,
    )(x, w1b, b1f, w2b, b2f)

    return out[:, :out_dim]


class MLPNetPallas:
    """Pallas-TPU equivalent of MLPNet.forward (inference mode; dropout = identity)."""

    def __init__(self, w1, b1, w2, b2, *, dropout=0.2, hidden_chunk=512):
        in_dim, hidden_dim = w1.shape
        out_dim = w2.shape[1]
        out_pad = _round_up(out_dim, 128)          # lane-dense output stores

        # ---- one-time parameter prep (hoisted out of the per-call forward) ----------
        b1 = jnp.reshape(b1, (1, -1)).astype(jnp.float32)
        b2 = jnp.reshape(b2, (1, -1)).astype(jnp.float32)
        if out_pad != out_dim:
            w2 = jnp.pad(w2, ((0, 0), (0, out_pad - out_dim)))
            b2 = jnp.pad(b2, ((0, 0), (0, out_pad - out_dim)), constant_values=_NEG_PAD)

        self.w1 = jax.device_put(w1.astype(jnp.bfloat16))
        self.b1 = jax.device_put(b1)
        self.w2 = jax.device_put(w2.astype(jnp.bfloat16))
        self.b2 = jax.device_put(b2)

        self.in_dim = in_dim
        self.hidden_dim = hidden_dim
        self.out_dim = out_dim
        self.dropout = dropout                      # identity at inference; kept for parity
        self.hidden_chunk = (hidden_chunk if hidden_dim % hidden_chunk == 0
                             else hidden_dim)
        self._num_cores = _tensorcores_per_chip()

    def __call__(self, x, *, tm=None):
        if tm is None:
            tm = _pick_row_tile(x.shape[0], self._num_cores)
        return _mlp_forward_impl(x, self.w1, self.b1, self.w2, self.b2,
                                 tm=tm, hidden_chunk=self.hidden_chunk,
                                 out_dim=self.out_dim)


# ----------------------------------------------------------------------------- helpers
def init_params(key, in_dim, hidden_dim, out_dim):
    """Deterministic init mimicking nn.Linear (uniform(-1/sqrt(fan_in), 1/sqrt(fan_in)))."""
    k1, k2, k3, k4 = jax.random.split(key, 4)
    bound1 = 1.0 / jnp.sqrt(in_dim)
    bound2 = 1.0 / jnp.sqrt(hidden_dim)
    # stored pre-transposed: (in_features, out_features)
    w1 = jax.random.uniform(k1, (in_dim, hidden_dim), jnp.float32, -bound1, bound1)
    b1 = jax.random.uniform(k2, (1, hidden_dim), jnp.float32, -bound1, bound1)
    w2 = jax.random.uniform(k3, (hidden_dim, out_dim), jnp.float32, -bound2, bound2)
    b2 = jax.random.uniform(k4, (1, out_dim), jnp.float32, -bound2, bound2)
    return w1, b1, w2, b2


def reference_forward_bf16(x, w1, b1, w2, b2):
    """Reference with the same bf16 quantization / f32 accumulation as the kernel."""
    xb, w1b, w2b = (a.astype(jnp.bfloat16) for a in (x, w1, w2))
    h = jnp.dot(xb, w1b, preferred_element_type=jnp.float32) + b1
    h = jnp.maximum(h, 0.0)
    y = jnp.dot(h.astype(jnp.bfloat16), w2b, preferred_element_type=jnp.float32) + b2
    return jax.nn.log_softmax(y, axis=1)


def reference_forward_f32(x, w1, b1, w2, b2):
    h = jnp.maximum(x @ w1 + b1, 0.0)
    y = h @ w2 + b2
    return jax.nn.log_softmax(y, axis=1)


if __name__ == "__main__":
    # N=500 exercises the partial last row tile; out_dim=10 exercises class-lane padding.
    N, in_dim, hidden_dim, out_dim = 500, 128, 256, 10

    key = jax.random.PRNGKey(0)
    kx, kp = jax.random.split(key)
    x = jax.random.normal(kx, (N, in_dim), jnp.float32)
    w1, b1, w2, b2 = init_params(kp, in_dim, hidden_dim, out_dim)

    model = MLPNetPallas(w1, b1, w2, b2)
    out = jax.block_until_ready(model(x))
    assert out.shape == (N, out_dim)

    ref_bf16 = reference_forward_bf16(x, w1, b1, w2, b2)
    assert jnp.allclose(out, ref_bf16, atol=2e-3, rtol=2e-3)
    ref_f32 = reference_forward_f32(x, w1, b1, w2, b2)
    assert jnp.allclose(out, ref_f32, atol=5e-2, rtol=5e-2)

    # Also exercise the multi-chunk (VMEM-accumulator) path with a larger hidden dim.
    N2, hidden2 = 200, 1024
    kx2, kp2 = jax.random.split(jax.random.PRNGKey(1))
    x2 = jax.random.normal(kx2, (N2, in_dim), jnp.float32)
    p2 = init_params(kp2, in_dim, hidden2, out_dim)
    model2 = MLPNetPallas(*p2, hidden_chunk=512)     # 1024 / 512 -> 2 chunks
    out2 = jax.block_until_ready(model2(x2))
    assert out2.shape == (N2, out_dim)
    assert jnp.allclose(out2, reference_forward_bf16(x2, *p2), atol=2e-3, rtol=2e-3)

    print("KERNEL_OK")
</pallas_src>

<mosaic_0001>
module attributes {stable_mosaic.version = 11 : i64} {
  func.func @mlp_kernel(%arg0: i32, %arg1: memref<512x128xf32, #tpu.memory_space<vmem>>, %arg2: memref<128x256xbf16, #tpu.memory_space<vmem>>, %arg3: memref<1x256xf32, #tpu.memory_space<vmem>>, %arg4: memref<256x128xbf16, #tpu.memory_space<vmem>>, %arg5: memref<1x128xf32, #tpu.memory_space<vmem>>, %arg6: memref<512x128xf32, #tpu.memory_space<vmem>>) attributes {dimension_semantics = [#tpu.dimension_semantics<parallel>], iteration_bounds = array<i64: 1>, scalar_prefetch = 0 : i64, scratch_operands = 0 : i64, tpu.core_type = #tpu.core_type<tc>, window_params = [{transform_indices = @transform_0, window_bounds = array<i64: 512, 128>}, {pipeline_mode = #tpu.pipeline_mode<synchronous>, transform_indices = @transform_1, window_bounds = array<i64: 128, 256>}, {pipeline_mode = #tpu.pipeline_mode<synchronous>, transform_indices = @transform_2, window_bounds = array<i64: 1, 256>}, {pipeline_mode = #tpu.pipeline_mode<synchronous>, transform_indices = @transform_3, window_bounds = array<i64: 256, 128>}, {pipeline_mode = #tpu.pipeline_mode<synchronous>, transform_indices = @transform_4, window_bounds = array<i64: 1, 128>}, {transform_indices = @transform_5, window_bounds = array<i64: 512, 128>}]} {
    %c0 = arith.constant 0 : index
    %c0_0 = arith.constant 0 : index
    %0 = vector.load %arg1[%c0, %c0_0] : memref<512x128xf32, #tpu.memory_space<vmem>>, vector<512x128xf32>
    %1 = arith.truncf %0 : vector<512x128xf32> to vector<512x128xbf16>
    %c0_1 = arith.constant 0 : index
    %c0_2 = arith.constant 0 : index
    %2 = vector.load %arg2[%c0_1, %c0_2] : memref<128x256xbf16, #tpu.memory_space<vmem>>, vector<128x256xbf16>
    %cst = arith.constant dense<0.000000e+00> : vector<512x256xf32>
    %3 = tpu.matmul %1, %2, %cst {dimension_numbers = #tpu.dot_dimension_numbers<[1], [0], [0], [1], [0, 0, 1, 1], [], []>} : vector<512x128xbf16>, vector<128x256xbf16>, vector<512x256xf32> -> vector<512x256xf32>
    %c0_3 = arith.constant 0 : index
    %c0_4 = arith.constant 0 : index
    %4 = vector.load %arg3[%c0_3, %c0_4] : memref<1x256xf32, #tpu.memory_space<vmem>>, vector<1x256xf32>
    %5 = vector.broadcast %4 : vector<1x256xf32> to vector<512x256xf32>
    %6 = arith.addf %3, %5 : vector<512x256xf32>
    %cst_5 = arith.constant 0.000000e+00 : f32
    %7 = vector.broadcast %cst_5 : f32 to vector<512x256xf32>
    %8 = arith.maximumf %6, %7 : vector<512x256xf32>
    %9 = arith.truncf %8 : vector<512x256xf32> to vector<512x256xbf16>
    %c0_6 = arith.constant 0 : index
    %c0_7 = arith.constant 0 : index
    %10 = vector.load %arg4[%c0_6, %c0_7] : memref<256x128xbf16, #tpu.memory_space<vmem>>, vector<256x128xbf16>
    %cst_8 = arith.constant dense<0.000000e+00> : vector<512x128xf32>
    %11 = tpu.matmul %9, %10, %cst_8 {dimension_numbers = #tpu.dot_dimension_numbers<[1], [0], [0], [1], [0, 0, 1, 1], [], []>} : vector<512x256xbf16>, vector<256x128xbf16>, vector<512x128xf32> -> vector<512x128xf32>
    %c0_9 = arith.constant 0 : index
    %c0_10 = arith.constant 0 : index
    %12 = vector.load %arg5[%c0_9, %c0_10] : memref<1x128xf32, #tpu.memory_space<vmem>>, vector<1x128xf32>
    %13 = vector.broadcast %12 : vector<1x128xf32> to vector<512x128xf32>
    %14 = arith.addf %11, %13 : vector<512x128xf32>
    %cst_11 = arith.constant dense<0xFF800000> : vector<512xf32>
    %15 = vector.multi_reduction <maximumf>, %14, %cst_11 [1] : vector<512x128xf32> to vector<512xf32>
    %16 = vector.shape_cast %15 : vector<512xf32> to vector<512x1xf32>
    %17 = vector.broadcast %16 : vector<512x1xf32> to vector<512x128xf32>
    %18 = arith.subf %14, %17 : vector<512x128xf32>
    %19 = math.exp %18 : vector<512x128xf32>
    %cst_12 = arith.constant dense<0.000000e+00> : vector<512xf32>
    %20 = vector.multi_reduction <add>, %19, %cst_12 [1] : vector<512x128xf32> to vector<512xf32>
    %21 = vector.shape_cast %20 : vector<512xf32> to vector<512x1xf32>
    %22 = math.log %21 : vector<512x1xf32>
    %23 = vector.broadcast %22 : vector<512x1xf32> to vector<512x128xf32>
    %24 = arith.subf %18, %23 : vector<512x128xf32>
    %c0_13 = arith.constant 0 : index
    %c0_14 = arith.constant 0 : index
    %25 = vector.load %arg6[%c0_13, %c0_14] : memref<512x128xf32, #tpu.memory_space<vmem>>, vector<512x128xf32>
    tpu.vector_store %arg6[%c0_13, %c0_14], %24 {strides = array<i32>} : memref<512x128xf32, #tpu.memory_space<vmem>>, vector<512x128xf32>,
    return
  }
  func.func @transform_0(%arg0: i32) -> (i32, i32) {
    %c0_i32 = arith.constant 0 : i32
    %c0_i32_0 = arith.constant 0 : i32
    return %arg0, %c0_i32 : i32, i32
  }
  func.func @transform_1(%arg0: i32) -> (i32, i32) {
    %c0_i32 = arith.constant 0 : i32
    %c0_i32_0 = arith.constant 0 : i32
    %c0_i32_1 = arith.constant 0 : i32
    return %c0_i32, %c0_i32_0 : i32, i32
  }
  func.func @transform_2(%arg0: i32) -> (i32, i32) {
    %c0_i32 = arith.constant 0 : i32
    %c0_i32_0 = arith.constant 0 : i32
    %c0_i32_1 = arith.constant 0 : i32
    return %c0_i32, %c0_i32_0 : i32, i32
  }
  func.func @transform_3(%arg0: i32) -> (i32, i32) {
    %c0_i32 = arith.constant 0 : i32
    %c0_i32_0 = arith.constant 0 : i32
    %c0_i32_1 = arith.constant 0 : i32
    return %c0_i32, %c0_i32_0 : i32, i32
  }
  func.func @transform_4(%arg0: i32) -> (i32, i32) {
    %c0_i32 = arith.constant 0 : i32
    %c0_i32_0 = arith.constant 0 : i32
    %c0_i32_1 = arith.constant 0 : i32
    return %c0_i32, %c0_i32_0 : i32, i32
  }
  func.func @transform_5(%arg0: i32) -> (i32, i32) {
    %c0_i32 = arith.constant 0 : i32
    %c0_i32_0 = arith.constant 0 : i32
    return %arg0, %c0_i32 : i32, i32
  }
}

</mosaic_0001>

<llo_original>
// kernel: _mlp_forward_impl.1
$region0: #{_mlp_forward_impl.1}
  #allocation0 [shape = 'u32[]', space=smem, size = 0x4, offset = 0x4, fixed_abs, tag = 'smem constant byte address 0x4 - core index']
  #allocation1 [shape = 'u32[144,128]{1,0:T(1,128)}', space=vmem, size = 0x12000, scoped, tag = 'internal scratch']
  %s0 = inlined_call_operand.hbm [shape: f32[500,128], index: 0, kind: input, shape index: {}]
  %s1 = inlined_call_operand.hbm [shape: bf16[128,256], index: 1, kind: input, shape index: {}]
  %s2 = inlined_call_operand.vmem [shape: f32[1,256], index: 2, kind: input, shape index: {}]
  %s3 = inlined_call_operand.hbm [shape: bf16[256,128], index: 3, kind: input, shape index: {}]
  %s4 = inlined_call_operand.vmem [shape: f32[1,128], index: 4, kind: input, shape index: {}]
  %s5 = inlined_call_operand.vmem [shape: f32[500,128], index: 5, kind: output, shape index: {}]
  %s6 = sld [smem:[#allocation0]]
  $region76: #{_mlp_forward_impl.1} parent=0
    _
  %s8 = ssub.s32 1, %s6
  %s9 = scalar_select 0, %s8, %s6
  $region1: #{_mlp_forward_impl.1} parent=0
    #allocation2 [shape = 'u8[262144]{0}', space=vmem, size = 0x40000, scoped, tag = 'input window, operand 0, single buffered']
    #allocation3 [shape = 's32[1]{0}', space=sflag, size = 0x4, scoped, tag = 'scoped memory for _mlp_forward_impl.1']
    #allocation4 [shape = 'u8[65536]{0}', space=vmem, size = 0x10000, scoped, tag = 'input window, operand 1, single buffered']
    #allocation5 [shape = 's32[1]{0}', space=sflag, size = 0x4, scoped, tag = 'scoped memory for _mlp_forward_impl.1']
    #allocation6 [shape = 'u8[65536]{0}', space=vmem, size = 0x10000, scoped, tag = 'input window, operand 3, single buffered']
    #allocation7 [shape = 'u8[262144]{0}', space=vmem, size = 0x40000, scoped, tag = 'output window, operand 0, single buffered']
    %10 = vsyncpa [#allocation3], 0
    %11 = vsyncpa [#allocation5], 0
    // Predicated region
    $region2: #{_mlp_forward_impl.1} parent=1 // pred_check
      _
    $region3: #{_mlp_forward_impl.1} parent=1 // pred_check_branch
      %13 = sbr.rel (0) target = $region5
    $region4: #{_mlp_forward_impl.1} parent=1 // pred_region
      %s15 = ssub.s32 8192, 8064
      %16 = vsyncadd [#allocation3], %s15
      %s17 = sshll.u32 [#allocation2], 4
      %s18 = int_to_ptr.vmem [resolvable:$true] %s17
      %23 = dma.hbm_to_vmem [thread:$0]  %s0, 8064, %s18, [#allocation3], 128, 128, 8
    $region5: #{_mlp_forward_impl.1} parent=1 // pred_fallthru
      _
    // Predicated region
    $region6: #{_mlp_forward_impl.1} parent=1 // pred_check
      _
    $region7: #{_mlp_forward_impl.1} parent=1 // pred_check_branch
      %25 = sbr.rel (0) target = $region9
    $region8: #{_mlp_forward_impl.1} parent=1 // pred_region
      %s27 = ssub.s32 2048, 2048
      %28 = vsyncadd [#allocation5], %s27
      %s29 = sshll.u32 [#allocation4], 4
      %s30 = int_to_ptr.vmem [resolvable:$true] %s29
      %35 = dma.hbm_to_vmem [thread:$0]  %s1, 2048, %s30, [#allocation5], 128, 128, 8
    $region9: #{_mlp_forward_impl.1} parent=1 // pred_fallthru
      _
    // Predicated region
    $region10: #{_mlp_forward_impl.1} parent=1 // pred_check
      _
    $region11: #{_mlp_forward_impl.1} parent=1 // pred_check_branch
      %37 = sbr.rel (0) target = $region13
    $region12: #{_mlp_forward_impl.1} parent=1 // pred_region
      _
    $region13: #{_mlp_forward_impl.1} parent=1 // pred_fallthru
      _
    // Predicated region
    $region14: #{_mlp_forward_impl.1} parent=1 // pred_check
      _
    $region15: #{_mlp_forward_impl.1} parent=1 // pred_check_branch
      %39 = sbr.rel (0) target = $region17
    $region16: #{_mlp_forward_impl.1} parent=1 // pred_region
      %s41 = ssub.s32 2048, 2048
      %42 = vsyncadd [#allocation5], %s41
      %s43 = sshll.u32 [#allocation6], 4
      %s44 = int_to_ptr.vmem [resolvable:$true] %s43
      %49 = dma.hbm_to_vmem [thread:$0]  %s3, 2048, %s44, [#allocation5], 64, 64, 4
    $region17: #{_mlp_forward_impl.1} parent=1 // pred_fallthru
      _
    // Predicated region
    $region18: #{_mlp_forward_impl.1} parent=1 // pred_check
      _
    $region19: #{_mlp_forward_impl.1} parent=1 // pred_check_branch
      %51 = sbr.rel (0) target = $region21
    $region20: #{_mlp_forward_impl.1} parent=1 // pred_region
      _
    $region21: #{_mlp_forward_impl.1} parent=1 // pred_fallthru
      _
    // Predicated region
    $region22: #{_mlp_forward_impl.1} parent=1 // pred_check
      _
    $region23: #{_mlp_forward_impl.1} parent=1 // pred_check_branch
      %53 = sbr.rel (0) target = $region25
    $region24: #{_mlp_forward_impl.1} parent=1 // pred_region
      %54 = dma.done [#allocation3], 8192
    $region25: #{_mlp_forward_impl.1} parent=1 // pred_fallthru
      _
    // Predicated region
    $region26: #{_mlp_forward_impl.1} parent=1 // pred_check
      _
    $region27: #{_mlp_forward_impl.1} parent=1 // pred_check_branch
      %56 = sbr.rel (0) target = $region29
    $region28: #{_mlp_forward_impl.1} parent=1 // pred_region
      %57 = dma.done [#allocation5], 2048
    $region29: #{_mlp_forward_impl.1} parent=1 // pred_fallthru
      _
    // Predicated region
    $region30: #{_mlp_forward_impl.1} parent=1 // pred_check
      _
    $region31: #{_mlp_forward_impl.1} parent=1 // pred_check_branch
      %59 = sbr.rel (0) target = $region33
    $region32: #{_mlp_forward_impl.1} parent=1 // pred_region
      %60 = dma.done [#allocation5], 2048
    $region33: #{_mlp_forward_impl.1} parent=1 // pred_fallthru
      _
    %v62 = vld [vmem:[#allocation2] sm:$0xff]
    %v63 = vld [vmem:[#allocation2 + $0x8] sm:$0xff]
    %v64 = vld [vmem:[#allocation2 + $0x10] sm:$0xff]
    %v65 = vld [vmem:[#allocation2 + $0x18] sm:$0xff]
    %v66 = vld [vmem:[#allocation2 + $0x20] sm:$0xff]
    %v67 = vld [vmem:[#allocation2 + $0x28] sm:$0xff]
    %v68 = vld [vmem:[#allocation2 + $0x30] sm:$0xff]
    %v69 = vld [vmem:[#allocation2 + $0x38] sm:$0xff]
    %v70 = vld [vmem:[#allocation2 + $0x40] sm:$0xff]
    %v71 = vld [vmem:[#allocation2 + $0x48] sm:$0xff]
    %v72 = vld [vmem:[#allocation2 + $0x50] sm:$0xff]
    %v73 = vld [vmem:[#allocation2 + $0x58] sm:$0xff]
    %v74 = vld [vmem:[#allocation2 + $0x60] sm:$0xff]
    %v75 = vld [vmem:[#allocation2 + $0x68] sm:$0xff]
    %v76 = vld [vmem:[#allocation2 + $0x70] sm:$0xff]
    %v77 = vld [vmem:[#allocation2 + $0x78] sm:$0xff]
    %v78 = vld [vmem:[#allocation2 + $0x80] sm:$0xff]
    %v79 = vld [vmem:[#allocation2 + $0x88] sm:$0xff]
    %v80 = vld [vmem:[#allocation2 + $0x90] sm:$0xff]
    %v81 = vld [vmem:[#allocation2 + $0x98] sm:$0xff]
    %v82 = vld [vmem:[#allocation2 + $0xa0] sm:$0xff]
    %v83 = vld [vmem:[#allocation2 + $0xa8] sm:$0xff]
    %v84 = vld [vmem:[#allocation2 + $0xb0] sm:$0xff]
    %v85 = vld [vmem:[#allocation2 + $0xb8] sm:$0xff]
    %v86 = vld [vmem:[#allocation2 + $0xc0] sm:$0xff]
    %v87 = vld [vmem:[#allocation2 + $0xc8] sm:$0xff]
    %v88 = vld [vmem:[#allocation2 + $0xd0] sm:$0xff]
    %v89 = vld [vmem:[#allocation2 + $0xd8] sm:$0xff]
    %v90 = vld [vmem:[#allocation2 + $0xe0] sm:$0xff]
    %v91 = vld [vmem:[#allocation2 + $0xe8] sm:$0xff]
    %v92 = vld [vmem:[#allocation2 + $0xf0] sm:$0xff]
    %v93 = vld [vmem:[#allocation2 + $0xf8] sm:$0xff]
    %v94 = vld [vmem:[#allocation2 + $0x100] sm:$0xff]
    %v95 = vld [vmem:[#allocation2 + $0x108] sm:$0xff]
    %v96 = vld [vmem:[#allocation2 + $0x110] sm:$0xff]
    %v97 = vld [vmem:[#allocation2 + $0x118] sm:$0xff]
    %v98 = vld [vmem:[#allocation2 + $0x120] sm:$0xff]
    %v99 = vld [vmem:[#allocation2 + $0x128] sm:$0xff]
    %v100 = vld [vmem:[#allocation2 + $0x130] sm:$0xff]
    %v101 = vld [vmem:[#allocation2 + $0x138] sm:$0xff]
    %v102 = vld [vmem:[#allocation2 + $0x140] sm:$0xff]
    %v103 = vld [vmem:[#allocation2 + $0x148] sm:$0xff]
    %v104 = vld [vmem:[#allocation2 + $0x150] sm:$0xff]
    %v105 = vld [vmem:[#allocation2 + $0x158] sm:$0xff]
    %v106 = vld [vmem:[#allocation2 + $0x160] sm:$0xff]
    %v107 = vld [vmem:[#allocation2 + $0x168] sm:$0xff]
    %v108 = vld [vmem:[#allocation2 + $0x170] sm:$0xff]
    %v109 = vld [vmem:[#allocation2 + $0x178] sm:$0xff]
    %v110 = vld [vmem:[#allocation2 + $0x180] sm:$0xff]
    %v111 = vld [vmem:[#allocation2 + $0x188] sm:$0xff]
    %v112 = vld [vmem:[#allocation2 + $0x190] sm:$0xff]
    %v113 = vld [vmem:[#allocation2 + $0x198] sm:$0xff]
    %v114 = vld [vmem:[#allocation2 + $0x1a0] sm:$0xff]
    %v115 = vld [vmem:[#allocation2 + $0x1a8] sm:$0xff]
    %v116 = vld [vmem:[#allocation2 + $0x1b0] sm:$0xff]
    %v117 = vld [vmem:[#allocation2 + $0x1b8] sm:$0xff]
    %v118 = vld [vmem:[#allocation2 + $0x1c0] sm:$0xff]
    %v119 = vld [vmem:[#allocation2 + $0x1c8] sm:$0xff]
    %v120 = vld [vmem:[#allocation2 + $0x1d0] sm:$0xff]
    %v121 = vld [vmem:[#allocation2 + $0x1d8] sm:$0xff]
    %v122 = vld [vmem:[#allocation2 + $0x1e0] sm:$0xff]
    %v123 = vld [vmem:[#allocation2 + $0x1e8] sm:$0xff]
    %v124 = vld [vmem:[#allocation2 + $0x1f0] sm:$0xff]
    %v125 = vld [vmem:[#allocation2 + $0x1f8] sm:$0xff]
    %v126 = vpack.c.bf16 %v63, %v62
    %v127 = vpack.c.bf16 %v65, %v64
    %v128 = vpack.c.bf16 %v67, %v66
    %v129 = vpack.c.bf16 %v69, %v68
    %v130 = vpack.c.bf16 %v71, %v70
    %v131 = vpack.c.bf16 %v73, %v72
    %v132 = vpack.c.bf16 %v75, %v74
    %v133 = vpack.c.bf16 %v77, %v76
    %v134 = vpack.c.bf16 %v79, %v78
    %v135 = vpack.c.bf16 %v81, %v80
    %v136 = vpack.c.bf16 %v83, %v82
    %v137 = vpack.c.bf16 %v85, %v84
    %v138 = vpack.c.bf16 %v87, %v86
    %v139 = vpack.c.bf16 %v89, %v88
    %v140 = vpack.c.bf16 %v91, %v90
    %v141 = vpack.c.bf16 %v93, %v92
    %v142 = vpack.c.bf16 %v95, %v94
    %v143 = vpack.c.bf16 %v97, %v96
    %v144 = vpack.c.bf16 %v99, %v98
    %v145 = vpack.c.bf16 %v101, %v100
    %v146 = vpack.c.bf16 %v103, %v102
    %v147 = vpack.c.bf16 %v105, %v104
    %v148 = vpack.c.bf16 %v107, %v106
    %v149 = vpack.c.bf16 %v109, %v108
    %v150 = vpack.c.bf16 %v111, %v110
    %v151 = vpack.c.bf16 %v113, %v112
    %v152 = vpack.c.bf16 %v115, %v114
    %v153 = vpack.c.bf16 %v117, %v116
    %v154 = vpack.c.bf16 %v119, %v118
    %v155 = vpack.c.bf16 %v121, %v120
    %v156 = vpack.c.bf16 %v123, %v122
    %v157 = vpack.c.bf16 %v125, %v124
    %v158 = vld [vmem:[#allocation4] sm:$0xff]
    %v159 = vld [vmem:[#allocation4 + $0x8] sm:$0xff]
    %v160 = vld [vmem:[#allocation4 + $0x10] sm:$0xff]
    %v161 = vld [vmem:[#allocation4 + $0x18] sm:$0xff]
    %v162 = vld [vmem:[#allocation4 + $0x20] sm:$0xff]
    %v163 = vld [vmem:[#allocation4 + $0x28] sm:$0xff]
    %v164 = vld [vmem:[#allocation4 + $0x30] sm:$0xff]
    %v165 = vld [vmem:[#allocation4 + $0x38] sm:$0xff]
    %v166 = vld [vmem:[#allocation4 + $0x40] sm:$0xff]
    %v167 = vld [vmem:[#allocation4 + $0x48] sm:$0xff]
    %v168 = vld [vmem:[#allocation4 + $0x50] sm:$0xff]
    %v169 = vld [vmem:[#allocation4 + $0x58] sm:$0xff]
    %v170 = vld [vmem:[#allocation4 + $0x60] sm:$0xff]
    %v171 = vld [vmem:[#allocation4 + $0x68] sm:$0xff]
    %v172 = vld [vmem:[#allocation4 + $0x70] sm:$0xff]
    %v173 = vld [vmem:[#allocation4 + $0x78] sm:$0xff]
    %v174 = vld [vmem:[%s2] sm:$0x3]
    %v176 = vlaneseq
    %v177 = vshrl.u32 %v176, 7
    %v178 = vsub.s32 0, %v177
    %v179 = vrot.slane %v174, %v178
    %v180 = vlaneseq
    %v181 = vshrl.u32 %v180, 7
    %v182 = vsub.s32 1, %v181
    %v183 = vrot.slane %v174, %v182
    %v202 = vunpack.c.l.b16 %v158
    %v203 = vunpack.c.h.b16 %v158
    %v204 = vunpack.c.l.b16 %v159
    %v205 = vunpack.c.h.b16 %v159
    %v206 = vunpack.c.l.b16 %v160
    %v207 = vunpack.c.h.b16 %v160
    %v208 = vunpack.c.l.b16 %v161
    %v209 = vunpack.c.h.b16 %v161
    %v210 = vunpack.c.l.b16 %v162
    %v211 = vunpack.c.h.b16 %v162
    %v212 = vunpack.c.l.b16 %v163
    %v213 = vunpack.c.h.b16 %v163
    %v214 = vunpack.c.l.b16 %v164
    %v215 = vunpack.c.h.b16 %v164
    %v216 = vunpack.c.l.b16 %v165
    %v217 = vunpack.c.h.b16 %v165
    %v218 = vunpack.c.l.b16 %v166
    %v219 = vunpack.c.h.b16 %v166
    %v220 = vunpack.c.l.b16 %v167
    %v221 = vunpack.c.h.b16 %v167
    %v222 = vunpack.c.l.b16 %v168
    %v223 = vunpack.c.h.b16 %v168
    %v224 = vunpack.c.l.b16 %v169
    %v225 = vunpack.c.h.b16 %v169
    %v226 = vunpack.c.l.b16 %v170
    %v227 = vunpack.c.h.b16 %v170
    %v228 = vunpack.c.l.b16 %v171
    %v229 = vunpack.c.h.b16 %v171
    %v230 = vunpack.c.l.b16 %v172
    %v231 = vunpack.c.h.b16 %v172
    %v232 = vunpack.c.l.b16 %v173
    %v233 = vunpack.c.h.b16 %v173
    %v234 = vpack.c.b16 %v204, %v202
    %v235 = vpack.c.b16 %v205, %v203
    %v236 = vpack.c.b16 %v208, %v206
    %v237 = vpack.c.b16 %v209, %v207
    %v238 = vpack.c.b16 %v212, %v210
    %v239 = vpack.c.b16 %v213, %v211
    %v240 = vpack.c.b16 %v216, %v214
    %v241 = vpack.c.b16 %v217, %v215
    %v242 = vpack.c.b16 %v220, %v218
    %v243 = vpack.c.b16 %v221, %v219
    %v244 = vpack.c.b16 %v224, %v222
    %v245 = vpack.c.b16 %v225, %v223
    %v246 = vpack.c.b16 %v228, %v226
    %v247 = vpack.c.b16 %v229, %v227
    %v248 = vpack.c.b16 %v232, %v230
    %v249 = vpack.c.b16 %v233, %v231
    %266 = vmatprep.subr.bf16.mxu0 %v235
    %267 = vmatpush1.bf16.msra.mxu0 %v234
    %268 = vmatprep.subr.bf16.mxu0 %v237
    %269 = vmatpush1.bf16.msra.mxu0 %v236
    %270 = vmatprep.subr.bf16.mxu0 %v239
    %271 = vmatpush1.bf16.msra.mxu0 %v238
    %272 = vmatprep.subr.bf16.mxu0 %v241
    %273 = vmatpush1.bf16.msra.mxu0 %v240
    %274 = vmatprep.subr.bf16.mxu0 %v243
    %275 = vmatpush1.bf16.msra.mxu0 %v242
    %276 = vmatprep.subr.bf16.mxu0 %v245
    %277 = vmatpush1.bf16.msra.mxu0 %v244
    %278 = vmatprep.subr.bf16.mxu0 %v247
    %279 = vmatpush1.bf16.msra.mxu0 %v246
    %280 = vmatprep.subr.bf16.mxu0 %v249
    %281 = vmatpush1.bf16.msra.mxu0 %v248
    %282 = vmatprep.subr.bf16.mxu0 0
    %283 = vmatpush1.bf16.msra.mxu0 0
    %284 = vmatprep.subr.bf16.mxu0 0
    %285 = vmatpush1.bf16.msra.mxu0 0
    %286 = vmatprep.subr.bf16.mxu0 0
    %287 = vmatpush1.bf16.msra.mxu0 0
    %288 = vmatprep.subr.bf16.mxu0 0
    %289 = vmatpush1.bf16.msra.mxu0 0
    %290 = vmatprep.subr.bf16.mxu0 0
    %291 = vmatpush1.bf16.msra.mxu0 0
    %292 = vmatprep.subr.bf16.mxu0 0
    %293 = vmatpush1.bf16.msra.mxu0 0
    %294 = vmatprep.subr.bf16.mxu0 0
    %295 = vmatpush1.bf16.msra.mxu0 0
    %296 = vmatprep.subr.bf16.mxu0 0
    %297 = vmatpush1.bf16.msra.mxu0 0
    %298 = vmatprep.mubr.bf16.mxu0 0
    %299 = vmatmul.mubr.bf16.gmra.mrb[0].mxu0 %v126
    %v300 = vpop.f32.mrb[0].mxu0
    %v301 = vadd.f32 %v179, %v300
    %v302 = vpop.f32.mrb[0].mxu0
    %v303 = vadd.f32 %v183, %v302
    %v304 = vpop.f32.mrb[0].mxu0
    %v305 = vadd.f32 %v179, %v304
    %v306 = vpop.f32.mrb[0].mxu0
    %v307 = vadd.f32 %v183, %v306
    %308 = vmatprep.mubr.bf16.mxu0 0
    %309 = vmatmul.mubr.bf16.gmra.mrb[0].mxu0 %v127
    %v310 = vpop.f32.mrb[0].mxu0
    %v311 = vadd.f32 %v179, %v310
    %v312 = vpop.f32.mrb[0].mxu0
    %v313 = vadd.f32 %v183, %v312
    %v314 = vpop.f32.mrb[0].mxu0
    %v315 = vadd.f32 %v179, %v314
    %v316 = vpop.f32.mrb[0].mxu0
    %v317 = vadd.f32 %v183, %v316
    %318 = vmatprep.mubr.bf16.mxu0 0
    %319 = vmatmul.mubr.bf16.gmra.mrb[0].mxu0 %v128
    %v320 = vpop.f32.mrb[0].mxu0
    %v321 = vadd.f32 %v179, %v320
    %v322 = vpop.f32.mrb[0].mxu0
    %v323 = vadd.f32 %v183, %v322
    %v324 = vpop.f32.mrb[0].mxu0
    %v325 = vadd.f32 %v179, %v324
    %v326 = vpop.f32.mrb[0].mxu0
    %v327 = vadd.f32 %v183, %v326
    %328 = vmatprep.mubr.bf16.mxu0 0
    %329 = vmatmul.mubr.bf16.gmra.mrb[0].mxu0 %v129
    %v330 = vpop.f32.mrb[0].mxu0
    %v331 = vadd.f32 %v179, %v330
    %v332 = vpop.f32.mrb[0].mxu0
    %v333 = vadd.f32 %v183, %v332
    %v334 = vpop.f32.mrb[0].mxu0
    %v335 = vadd.f32 %v179, %v334
    %v336 = vpop.f32.mrb[0].mxu0
    %v337 = vadd.f32 %v183, %v336
    %338 = vmatprep.mubr.bf16.mxu0 0
    %339 = vmatmul.mubr.bf16.gmra.mrb[0].mxu0 %v130
    %v340 = vpop.f32.mrb[0].mxu0
    %v341 = vadd.f32 %v179, %v340
    %v342 = vpop.f32.mrb[0].mxu0
    %v343 = vadd.f32 %v183, %v342
    %v344 = vpop.f32.mrb[0].mxu0
    %v345 = vadd.f32 %v179, %v344
    %v346 = vpop.f32.mrb[0].mxu0
    %v347 = vadd.f32 %v183, %v346
    %348 = vmatprep.mubr.bf16.mxu0 0
    %349 = vmatmul.mubr.bf16.gmra.mrb[0].mxu0 %v131
    %v350 = vpop.f32.mrb[0].mxu0
    %v351 = vadd.f32 %v179, %v350
    %v352 = vpop.f32.mrb[0].mxu0
    %v353 = vadd.f32 %v183, %v352
    %v354 = vpop.f32.mrb[0].mxu0
    %v355 = vadd.f32 %v179, %v354
    %v356 = vpop.f32.mrb[0].mxu0
    %v357 = vadd.f32 %v183, %v356
    %358 = vmatprep.mubr.bf16.mxu0 0
    %359 = vmatmul.mubr.bf16.gmra.mrb[0].mxu0 %v132
    %v360 = vpop.f32.mrb[0].mxu0
    %v361 = vadd.f32 %v179, %v360
    %v362 = vpop.f32.mrb[0].mxu0
    %v363 = vadd.f32 %v183, %v362
    %v364 = vpop.f32.mrb[0].mxu0
    %v365 = vadd.f32 %v179, %v364
    %v366 = vpop.f32.mrb[0].mxu0
    %v367 = vadd.f32 %v183, %v366
    %368 = vmatprep.mubr.bf16.mxu0 0
    %369 = vmatmul.mubr.bf16.gmra.mrb[0].mxu0 %v133
    %v370 = vpop.f32.mrb[0].mxu0
    %v371 = vadd.f32 %v179, %v370
    %v372 = vpop.f32.mrb[0].mxu0
    %v373 = vadd.f32 %v183, %v372
    %v374 = vpop.f32.mrb[0].mxu0
    %v375 = vadd.f32 %v179, %v374
    %v376 = vpop.f32.mrb[0].mxu0
    %v377 = vadd.f32 %v183, %v376
    %378 = vmatprep.mubr.bf16.mxu0 0
    %379 = vmatmul.mubr.bf16.gmra.mrb[0].mxu0 %v134
    %v380 = vpop.f32.mrb[0].mxu0
    %v381 = vadd.f32 %v179, %v380
    %v382 = vpop.f32.mrb[0].mxu0
    %v383 = vadd.f32 %v183, %v382
    %v384 = vpop.f32.mrb[0].mxu0
    %v385 = vadd.f32 %v179, %v384
    %v386 = vpop.f32.mrb[0].mxu0
    %v387 = vadd.f32 %v183, %v386
    %388 = vmatprep.mubr.bf16.mxu0 0
    %389 = vmatmul.mubr.bf16.gmra.mrb[0].mxu0 %v135
    %v390 = vpop.f32.mrb[0].mxu0
    %v391 = vadd.f32 %v179, %v390
    %v392 = vpop.f32.mrb[0].mxu0
    %v393 = vadd.f32 %v183, %v392
    %v394 = vpop.f32.mrb[0].mxu0
    %v395 = vadd.f32 %v179, %v394
    %v396 = vpop.f32.mrb[0].mxu0
    %v397 = vadd.f32 %v183, %v396
    %398 = vmatprep.mubr.bf16.mxu0 0
    %399 = vmatmul.mubr.bf16.gmra.mrb[0].mxu0 %v136
    %v400 = vpop.f32.mrb[0].mxu0
    %v401 = vadd.f32 %v179, %v400
    %v402 = vpop.f32.mrb[0].mxu0
    %v403 = vadd.f32 %v183, %v402
    %v404 = vpop.f32.mrb[0].mxu0
    %v405 = vadd.f32 %v179, %v404
    %v406 = vpop.f32.mrb[0].mxu0
    %v407 = vadd.f32 %v183, %v406
    %408 = vmatprep.mubr.bf16.mxu0 0
    %409 = vmatmul.mubr.bf16.gmra.mrb[0].mxu0 %v137
    %v410 = vpop.f32.mrb[0].mxu0
    %v411 = vadd.f32 %v179, %v410
    %v412 = vpop.f32.mrb[0].mxu0
    %v413 = vadd.f32 %v183, %v412
    %v414 = vpop.f32.mrb[0].mxu0
    %v415 = vadd.f32 %v179, %v414
    %v416 = vpop.f32.mrb[0].mxu0
    %v417 = vadd.f32 %v183, %v416
    %418 = vmatprep.mubr.bf16.mxu0 0
    %419 = vmatmul.mubr.bf16.gmra.mrb[0].mxu0 %v138
    %v420 = vpop.f32.mrb[0].mxu0
    %v421 = vadd.f32 %v179, %v420
    %v422 = vpop.f32.mrb[0].mxu0
    %v423 = vadd.f32 %v183, %v422
    %v424 = vpop.f32.mrb[0].mxu0
    %v425 = vadd.f32 %v179, %v424
    %v426 = vpop.f32.mrb[0].mxu0
    %v427 = vadd.f32 %v183, %v426
    %428 = vmatprep.mubr.bf16.mxu0 0
    %429 = vmatmul.mubr.bf16.gmra.mrb[0].mxu0 %v139
    %v430 = vpop.f32.mrb[0].mxu0
    %v431 = vadd.f32 %v179, %v430
    %v432 = vpop.f32.mrb[0].mxu0
    %v433 = vadd.f32 %v183, %v432
    %v434 = vpop.f32.mrb[0].mxu0
    %v435 = vadd.f32 %v179, %v434
    %v436 = vpop.f32.mrb[0].mxu0
    %v437 = vadd.f32 %v183, %v436
    %438 = vmatprep.mubr.bf16.mxu0 0
    %439 = vmatmul.mubr.bf16.gmra.mrb[0].mxu0 %v140
    %v440 = vpop.f32.mrb[0].mxu0
    %v441 = vadd.f32 %v179, %v440
    %v442 = vpop.f32.mrb[0].mxu0
    %v443 = vadd.f32 %v183, %v442
    %v444 = vpop.f32.mrb[0].mxu0
    %v445 = vadd.f32 %v179, %v444
    %v446 = vpop.f32.mrb[0].mxu0
    %v447 = vadd.f32 %v183, %v446
    %448 = vmatprep.mubr.bf16.mxu0 0
    %449 = vmatmul.mubr.bf16.gmra.mrb[0].mxu0 %v141
    %v450 = vpop.f32.mrb[0].mxu0
    %v451 = vadd.f32 %v179, %v450
    %v452 = vpop.f32.mrb[0].mxu0
    %v453 = vadd.f32 %v183, %v452
    %v454 = vpop.f32.mrb[0].mxu0
    %v455 = vadd.f32 %v179, %v454
    %v456 = vpop.f32.mrb[0].mxu0
    %v457 = vadd.f32 %v183, %v456
    %458 = vmatprep.mubr.bf16.mxu0 0
    %459 = vmatmul.mubr.bf16.gmra.mrb[0].mxu0 %v142
    %v460 = vpop.f32.mrb[0].mxu0
    %v461 = vadd.f32 %v179, %v460
    %v462 = vpop.f32.mrb[0].mxu0
    %v463 = vadd.f32 %v183, %v462
    %v464 = vpop.f32.mrb[0].mxu0
    %v465 = vadd.f32 %v179, %v464
    %v466 = vpop.f32.mrb[0].mxu0
    %v467 = vadd.f32 %v183, %v466
    %468 = vmatprep.mubr.bf16.mxu0 0
    %469 = vmatmul.mubr.bf16.gmra.mrb[0].mxu0 %v143
    %v470 = vpop.f32.mrb[0].mxu0
    %v471 = vadd.f32 %v179, %v470
    %v472 = vpop.f32.mrb[0].mxu0
    %v473 = vadd.f32 %v183, %v472
    %v474 = vpop.f32.mrb[0].mxu0
    %v475 = vadd.f32 %v179, %v474
    %v476 = vpop.f32.mrb[0].mxu0
    %v477 = vadd.f32 %v183, %v476
    %478 = vmatprep.mubr.bf16.mxu0 0
    %479 = vmatmul.mubr.bf16.gmra.mrb[0].mxu0 %v144
    %v480 = vpop.f32.mrb[0].mxu0
    %v481 = vadd.f32 %v179, %v480
    %v482 = vpop.f32.mrb[0].mxu0
    %v483 = vadd.f32 %v183, %v482
    %v484 = vpop.f32.mrb[0].mxu0
    %v485 = vadd.f32 %v179, %v484
    %v486 = vpop.f32.mrb[0].mxu0
    %v487 = vadd.f32 %v183, %v486
    %488 = vmatprep.mubr.bf16.mxu0 0
    %489 = vmatmul.mubr.bf16.gmra.mrb[0].mxu0 %v145
    %v490 = vpop.f32.mrb[0].mxu0
    %v491 = vadd.f32 %v179, %v490
    %v492 = vpop.f32.mrb[0].mxu0
    %v493 = vadd.f32 %v183, %v492
    %v494 = vpop.f32.mrb[0].mxu0
    %v495 = vadd.f32 %v179, %v494
    %v496 = vpop.f32.mrb[0].mxu0
    %v497 = vadd.f32 %v183, %v496
    %498 = vmatprep.mubr.bf16.mxu0 0
    %499 = vmatmul.mubr.bf16.gmra.mrb[0].mxu0 %v146
    %v500 = vpop.f32.mrb[0].mxu0
    %v501 = vadd.f32 %v179, %v500
    %v502 = vpop.f32.mrb[0].mxu0
    %v503 = vadd.f32 %v183, %v502
    %v504 = vpop.f32.mrb[0].mxu0
    %v505 = vadd.f32 %v179, %v504
    %v506 = vpop.f32.mrb[0].mxu0
    %v507 = vadd.f32 %v183, %v506
    %508 = vmatprep.mubr.bf16.mxu0 0
    %509 = vmatmul.mubr.bf16.gmra.mrb[0].mxu0 %v147
    %v510 = vpop.f32.mrb[0].mxu0
    %v511 = vadd.f32 %v179, %v510
    %v512 = vpop.f32.mrb[0].mxu0
    %v513 = vadd.f32 %v183, %v512
    %v514 = vpop.f32.mrb[0].mxu0
    %v515 = vadd.f32 %v179, %v514
    %v516 = vpop.f32.mrb[0].mxu0
    %v517 = vadd.f32 %v183, %v516
    %518 = vmatprep.mubr.bf16.mxu0 0
    %519 = vmatmul.mubr.bf16.gmra.mrb[0].mxu0 %v148
    %v520 = vpop.f32.mrb[0].mxu0
    %v521 = vadd.f32 %v179, %v520
    %v522 = vpop.f32.mrb[0].mxu0
    %v523 = vadd.f32 %v183, %v522
    %v524 = vpop.f32.mrb[0].mxu0
    %v525 = vadd.f32 %v179, %v524
    %v526 = vpop.f32.mrb[0].mxu0
    %v527 = vadd.f32 %v183, %v526
    %528 = vmatprep.mubr.bf16.mxu0 0
    %529 = vmatmul.mubr.bf16.gmra.mrb[0].mxu0 %v149
    %v530 = vpop.f32.mrb[0].mxu0
    %v531 = vadd.f32 %v179, %v530
    %v532 = vpop.f32.mrb[0].mxu0
    %v533 = vadd.f32 %v183, %v532
    %v534 = vpop.f32.mrb[0].mxu0
    %v535 = vadd.f32 %v179, %v534
    %v536 = vpop.f32.mrb[0].mxu0
    %v537 = vadd.f32 %v183, %v536
    %538 = vmatprep.mubr.bf16.mxu0 0
    %539 = vmatmul.mubr.bf16.gmra.mrb[0].mxu0 %v150
    %v540 = vpop.f32.mrb[0].mxu0
    %v541 = vadd.f32 %v179, %v540
    %v542 = vpop.f32.mrb[0].mxu0
    %v543 = vadd.f32 %v183, %v542
    %v544 = vpop.f32.mrb[0].mxu0
    %v545 = vadd.f32 %v179, %v544
    %v546 = vpop.f32.mrb[0].mxu0
    %v547 = vadd.f32 %v183, %v546
    %548 = vmatprep.mubr.bf16.mxu0 0
    %549 = vmatmul.mubr.bf16.gmra.mrb[0].mxu0 %v151
    %v550 = vpop.f32.mrb[0].mxu0
    %v551 = vadd.f32 %v179, %v550
    %v552 = vpop.f32.mrb[0].mxu0
    %v553 = vadd.f32 %v183, %v552
    %v554 = vpop.f32.mrb[0].mxu0
    %v555 = vadd.f32 %v179, %v554
    %v556 = vpop.f32.mrb[0].mxu0
    %v557 = vadd.f32 %v183, %v556
    %558 = vmatprep.mubr.bf16.mxu0 0
    %559 = vmatmul.mubr.bf16.gmra.mrb[0].mxu0 %v152
    %v560 = vpop.f32.mrb[0].mxu0
    %v561 = vadd.f32 %v179, %v560
    %v562 = vpop.f32.mrb[0].mxu0
    %v563 = vadd.f32 %v183, %v562
    %v564 = vpop.f32.mrb[0].mxu0
    %v565 = vadd.f32 %v179, %v564
    %v566 = vpop.f32.mrb[0].mxu0
    %v567 = vadd.f32 %v183, %v566
    %568 = vmatprep.mubr.bf16.mxu0 0
    %569 = vmatmul.mubr.bf16.gmra.mrb[0].mxu0 %v153
    %v570 = vpop.f32.mrb[0].mxu0
    %v571 = vadd.f32 %v179, %v570
    %v572 = vpop.f32.mrb[0].mxu0
    %v573 = vadd.f32 %v183, %v572
    %v574 = vpop.f32.mrb[0].mxu0
    %v575 = vadd.f32 %v179, %v574
    %v576 = vpop.f32.mrb[0].mxu0
    %v577 = vadd.f32 %v183, %v576
    %578 = vmatprep.mubr.bf16.mxu0 0
    %579 = vmatmul.mubr.bf16.gmra.mrb[0].mxu0 %v154
    %v580 = vpop.f32.mrb[0].mxu0
    %v581 = vadd.f32 %v179, %v580
    %v582 = vpop.f32.mrb[0].mxu0
    %v583 = vadd.f32 %v183, %v582
    %v584 = vpop.f32.mrb[0].mxu0
    %v585 = vadd.f32 %v179, %v584
    %v586 = vpop.f32.mrb[0].mxu0
    %v587 = vadd.f32 %v183, %v586
    %588 = vmatprep.mubr.bf16.mxu0 0
    %589 = vmatmul.mubr.bf16.gmra.mrb[0].mxu0 %v155
    %v590 = vpop.f32.mrb[0].mxu0
    %v591 = vadd.f32 %v179, %v590
    %v592 = vpop.f32.mrb[0].mxu0
    %v593 = vadd.f32 %v183, %v592
    %v594 = vpop.f32.mrb[0].mxu0
    %v595 = vadd.f32 %v179, %v594
    %v596 = vpop.f32.mrb[0].mxu0
    %v597 = vadd.f32 %v183, %v596
    %598 = vmatprep.mubr.bf16.mxu0 0
    %599 = vmatmul.mubr.bf16.gmra.mrb[0].mxu0 %v156
    %v600 = vpop.f32.mrb[0].mxu0
    %v601 = vadd.f32 %v179, %v600
    %v602 = vpop.f32.mrb[0].mxu0
    %v603 = vadd.f32 %v183, %v602
    %v604 = vpop.f32.mrb[0].mxu0
    %v605 = vadd.f32 %v179, %v604
    %v606 = vpop.f32.mrb[0].mxu0
    %v607 = vadd.f32 %v183, %v606
    %608 = vmatprep.mubr.bf16.mxu0 0
    %609 = vmatmul.mubr.bf16.gmra.mrb[0].mxu0 %v157
    %v610 = vpop.f32.mrb[0].mxu0
    %v611 = vadd.f32 %v179, %v610
    %v612 = vpop.f32.mrb[0].mxu0
    %v613 = vadd.f32 %v183, %v612
    %v614 = vpop.f32.mrb[0].mxu0
    %v615 = vadd.f32 %v179, %v614
    %v616 = vpop.f32.mrb[0].mxu0
    %v617 = vadd.f32 %v183, %v616
    %618 = vdwg.mxu0
    %v619 = vmax.f32 %v301, 0.0
    %v620 = vmax.f32 %v303, 0.0
    %v621 = vmax.f32 %v305, 0.0
    %v622 = vmax.f32 %v307, 0.0
    %v623 = vmax.f32 %v311, 0.0
    %v624 = vmax.f32 %v313, 0.0
    %v625 = vmax.f32 %v315, 0.0
    %v626 = vmax.f32 %v317, 0.0
    %v627 = vmax.f32 %v321, 0.0
    %v628 = vmax.f32 %v323, 0.0
    %v629 = vmax.f32 %v325, 0.0
    %v630 = vmax.f32 %v327, 0.0
    %v631 = vmax.f32 %v331, 0.0
    %v632 = vmax.f32 %v333, 0.0
    %v633 = vmax.f32 %v335, 0.0
    %v634 = vmax.f32 %v337, 0.0
    %v635 = vmax.f32 %v341, 0.0
    %v636 = vmax.f32 %v343, 0.0
    %v637 = vmax.f32 %v345, 0.0
    %v638 = vmax.f32 %v347, 0.0
    %v639 = vmax.f32 %v351, 0.0
    %v640 = vmax.f32 %v353, 0.0
    %v641 = vmax.f32 %v355, 0.0
    %v642 = vmax.f32 %v357, 0.0
    %v643 = vmax.f32 %v361, 0.0
    %v644 = vmax.f32 %v363, 0.0
    %v645 = vmax.f32 %v365, 0.0
    %v646 = vmax.f32 %v367, 0.0
    %v647 = vmax.f32 %v371, 0.0
    %v648 = vmax.f32 %v373, 0.0
    %v649 = vmax.f32 %v375, 0.0
    %v650 = vmax.f32 %v377, 0.0
    %v651 = vmax.f32 %v381, 0.0
    %v652 = vmax.f32 %v383, 0.0
    %v653 = vmax.f32 %v385, 0.0
    %v654 = vmax.f32 %v387, 0.0
    %v655 = vmax.f32 %v391, 0.0
    %v656 = vmax.f32 %v393, 0.0
    %v657 = vmax.f32 %v395, 0.0
    %v658 = vmax.f32 %v397, 0.0
    %v659 = vmax.f32 %v401, 0.0
    %v660 = vmax.f32 %v403, 0.0
    %v661 = vmax.f32 %v405, 0.0
    %v662 = vmax.f32 %v407, 0.0
    %v663 = vmax.f32 %v411, 0.0
    %v664 = vmax.f32 %v413, 0.0
    %v665 = vmax.f32 %v415, 0.0
    %v666 = vmax.f32 %v417, 0.0
    %v667 = vmax.f32 %v421, 0.0
    %v668 = vmax.f32 %v423, 0.0
    %v669 = vmax.f32 %v425, 0.0
    %v670 = vmax.f32 %v427, 0.0
    %v671 = vmax.f32 %v431, 0.0
    %v672 = vmax.f32 %v433, 0.0
    %v673 = vmax.f32 %v435, 0.0
    %v674 = vmax.f32 %v437, 0.0
    %v675 = vmax.f32 %v441, 0.0
    %v676 = vmax.f32 %v443, 0.0
    %v677 = vmax.f32 %v445, 0.0
    %v678 = vmax.f32 %v447, 0.0
    %v679 = vmax.f32 %v451, 0.0
    %v680 = vmax.f32 %v453, 0.0
    %v681 = vmax.f32 %v455, 0.0
    %v682 = vmax.f32 %v457, 0.0
    %v683 = vmax.f32 %v461, 0.0
    %v684 = vmax.f32 %v463, 0.0
    %v685 = vmax.f32 %v465, 0.0
    %v686 = vmax.f32 %v467, 0.0
    %v687 = vmax.f32 %v471, 0.0
    %v688 = vmax.f32 %v473, 0.0
    %v689 = vmax.f32 %v475, 0.0
    %v690 = vmax.f32 %v477, 0.0
    %v691 = vmax.f32 %v481, 0.0
    %v692 = vmax.f32 %v483, 0.0
    %v693 = vmax.f32 %v485, 0.0
    %v694 = vmax.f32 %v487, 0.0
    %v695 = vmax.f32 %v491, 0.0
    %v696 = vmax.f32 %v493, 0.0
    %v697 = vmax.f32 %v495, 0.0
    %v698 = vmax.f32 %v497, 0.0
    %v699 = vmax.f32 %v501, 0.0
    %v700 = vmax.f32 %v503, 0.0
    %v701 = vmax.f32 %v505, 0.0
    %v702 = vmax.f32 %v507, 0.0
    %v703 = vmax.f32 %v511, 0.0
    %v704 = vmax.f32 %v513, 0.0
    %v705 = vmax.f32 %v515, 0.0
    %v706 = vmax.f32 %v517, 0.0
    %v707 = vmax.f32 %v521, 0.0
    %v708 = vmax.f32 %v523, 0.0
    %v709 = vmax.f32 %v525, 0.0
    %v710 = vmax.f32 %v527, 0.0
    %v711 = vmax.f32 %v531, 0.0
    %v712 = vmax.f32 %v533, 0.0
    %v713 = vmax.f32 %v535, 0.0
    %v714 = vmax.f32 %v537, 0.0
    %v715 = vmax.f32 %v541, 0.0
    %v716 = vmax.f32 %v543, 0.0
    %v717 = vmax.f32 %v545, 0.0
    %v718 = vmax.f32 %v547, 0.0
    %v719 = vmax.f32 %v551, 0.0
    %v720 = vmax.f32 %v553, 0.0
    %v721 = vmax.f32 %v555, 0.0
    %v722 = vmax.f32 %v557, 0.0
    %v723 = vmax.f32 %v561, 0.0
    %v724 = vmax.f32 %v563, 0.0
    %v725 = vmax.f32 %v565, 0.0
    %v726 = vmax.f32 %v567, 0.0
    %v727 = vmax.f32 %v571, 0.0
    %v728 = vmax.f32 %v573, 0.0
    %v729 = vmax.f32 %v575, 0.0
    %v730 = vmax.f32 %v577, 0.0
    %v731 = vmax.f32 %v581, 0.0
    %v732 = vmax.f32 %v583, 0.0
    %v733 = vmax.f32 %v585, 0.0
    %v734 = vmax.f32 %v587, 0.0
    %v735 = vmax.f32 %v591, 0.0
    %v736 = vmax.f32 %v593, 0.0
    %v737 = vmax.f32 %v595, 0.0
    %v738 = vmax.f32 %v597, 0.0
    %v739 = vmax.f32 %v601, 0.0
    %v740 = vmax.f32 %v603, 0.0
    %v741 = vmax.f32 %v605, 0.0
    %v742 = vmax.f32 %v607, 0.0
    %v743 = vmax.f32 %v611, 0.0
    %v744 = vmax.f32 %v613, 0.0
    %v745 = vmax.f32 %v615, 0.0
    %v746 = vmax.f32 %v617, 0.0
    %v747 = vpack.c.bf16 %v621, %v619
    %v748 = vpack.c.bf16 %v622, %v620
    %v749 = vpack.c.bf16 %v625, %v623
    %v750 = vpack.c.bf16 %v626, %v624
    %v751 = vpack.c.bf16 %v629, %v627
    %v752 = vpack.c.bf16 %v630, %v628
    %v753 = vpack.c.bf16 %v633, %v631
    %v754 = vpack.c.bf16 %v634, %v632
    %v755 = vpack.c.bf16 %v637, %v635
    %v756 = vpack.c.bf16 %v638, %v636
    %v757 = vpack.c.bf16 %v641, %v639
    %v758 = vpack.c.bf16 %v642, %v640
    %v759 = vpack.c.bf16 %v645, %v643
    %v760 = vpack.c.bf16 %v646, %v644
    %v761 = vpack.c.bf16 %v649, %v647
    %v762 = vpack.c.bf16 %v650, %v648
    %v763 = vpack.c.bf16 %v653, %v651
    %v764 = vpack.c.bf16 %v654, %v652
    %v765 = vpack.c.bf16 %v657, %v655
    %v766 = vpack.c.bf16 %v658, %v656
    %v767 = vpack.c.bf16 %v661, %v659
    %v768 = vpack.c.bf16 %v662, %v660
    %v769 = vpack.c.bf16 %v665, %v663
    %v770 = vpack.c.bf16 %v666, %v664
    %v771 = vpack.c.bf16 %v669, %v667
    %v772 = vpack.c.bf16 %v670, %v668
    %v773 = vpack.c.bf16 %v673, %v671
    %v774 = vpack.c.bf16 %v674, %v672
    %v775 = vpack.c.bf16 %v677, %v675
    %v776 = vpack.c.bf16 %v678, %v676
    %v777 = vpack.c.bf16 %v681, %v679
    %v778 = vpack.c.bf16 %v682, %v680
    %v779 = vpack.c.bf16 %v685, %v683
    %v780 = vpack.c.bf16 %v686, %v684
    %v781 = vpack.c.bf16 %v689, %v687
    %v782 = vpack.c.bf16 %v690, %v688
    %v783 = vpack.c.bf16 %v693, %v691
    %v784 = vpack.c.bf16 %v694, %v692
    %v785 = vpack.c.bf16 %v697, %v695
    %v786 = vpack.c.bf16 %v698, %v696
    %v787 = vpack.c.bf16 %v701, %v699
    %v788 = vpack.c.bf16 %v702, %v700
    %v789 = vpack.c.bf16 %v705, %v703
    %v790 = vpack.c.bf16 %v706, %v704
    %v791 = vpack.c.bf16 %v709, %v707
    %v792 = vpack.c.bf16 %v710, %v708
    %v793 = vpack.c.bf16 %v713, %v711
    %v794 = vpack.c.bf16 %v714, %v712
    %v795 = vpack.c.bf16 %v717, %v715
    %v796 = vpack.c.bf16 %v718, %v716
    %v797 = vpack.c.bf16 %v721, %v719
    %v798 = vpack.c.bf16 %v722, %v720
    %v799 = vpack.c.bf16 %v725, %v723
    %v800 = vpack.c.bf16 %v726, %v724
    %v801 = vpack.c.bf16 %v729, %v727
    %v802 = vpack.c.bf16 %v730, %v728
    %v803 = vpack.c.bf16 %v733, %v731
    %v804 = vpack.c.bf16 %v734, %v732
    %v805 = vpack.c.bf16 %v737, %v735
    %v806 = vpack.c.bf16 %v738, %v736
    %v807 = vpack.c.bf16 %v741, %v739
    %v808 = vpack.c.bf16 %v742, %v740
    %v809 = vpack.c.bf16 %v745, %v743
    %v810 = vpack.c.bf16 %v746, %v744
    %v811 = vld [vmem:[#allocation6] sm:$0xf]
    %v812 = vld [vmem:[#allocation6 + $0x4] sm:$0xf]
    %v813 = vld [vmem:[#allocation6 + $0x8] sm:$0xf]
    %v814 = vld [vmem:[#allocation6 + $0xc] sm:$0xf]
    %v815 = vld [vmem:[#allocation6 + $0x10] sm:$0xf]
    %v816 = vld [vmem:[#allocation6 + $0x14] sm:$0xf]
    %v817 = vld [vmem:[#allocation6 + $0x18] sm:$0xf]
    %v818 = vld [vmem:[#allocation6 + $0x1c] sm:$0xf]
    %v819 = vld [vmem:[#allocation6 + $0x20] sm:$0xf]
    %v820 = vld [vmem:[#allocation6 + $0x24] sm:$0xf]
    %v821 = vld [vmem:[#allocation6 + $0x28] sm:$0xf]
    %v822 = vld [vmem:[#allocation6 + $0x2c] sm:$0xf]
    %v823 = vld [vmem:[#allocation6 + $0x30] sm:$0xf]
    %v824 = vld [vmem:[#allocation6 + $0x34] sm:$0xf]
    %v825 = vld [vmem:[#allocation6 + $0x38] sm:$0xf]
    %v826 = vld [vmem:[#allocation6 + $0x3c] sm:$0xf]
    %v827 = vld [vmem:[#allocation6 + $0x40] sm:$0xf]
    %v828 = vld [vmem:[#allocation6 + $0x44] sm:$0xf]
    %v829 = vld [vmem:[#allocation6 + $0x48] sm:$0xf]
    %v830 = vld [vmem:[#allocation6 + $0x4c] sm:$0xf]
    %v831 = vld [vmem:[#allocation6 + $0x50] sm:$0xf]
    %v832 = vld [vmem:[#allocation6 + $0x54] sm:$0xf]
    %v833 = vld [vmem:[#allocation6 + $0x58] sm:$0xf]
    %v834 = vld [vmem:[#allocation6 + $0x5c] sm:$0xf]
    %v835 = vld [vmem:[#allocation6 + $0x60] sm:$0xf]
    %v836 = vld [vmem:[#allocation6 + $0x64] sm:$0xf]
    %v837 = vld [vmem:[#allocation6 + $0x68] sm:$0xf]
    %v838 = vld [vmem:[#allocation6 + $0x6c] sm:$0xf]
    %v839 = vld [vmem:[#allocation6 + $0x70] sm:$0xf]
    %v840 = vld [vmem:[#allocation6 + $0x74] sm:$0xf]
    %v841 = vld [vmem:[#allocation6 + $0x78] sm:$0xf]
    %v842 = vld [vmem:[#allocation6 + $0x7c] sm:$0xf]
    %v843 = vld [vmem:[%s4] sm:$0x1]
    %v845 = vlaneseq
    %v846 = vshrl.u32 %v845, 7
    %v847 = vsub.s32 0, %v846
    %v848 = vrot.slane %v843, %v847
    %v882 = vunpack.c.l.b16 %v811
    %v883 = vunpack.c.l.b16 %v812
    %v884 = vunpack.c.l.b16 %v813
    %v885 = vunpack.c.l.b16 %v814
    %v886 = vunpack.c.l.b16 %v815
    %v887 = vunpack.c.l.b16 %v816
    %v888 = vunpack.c.l.b16 %v817
    %v889 = vunpack.c.l.b16 %v818
    %v890 = vunpack.c.l.b16 %v819
    %v891 = vunpack.c.l.b16 %v820
    %v892 = vunpack.c.l.b16 %v821
    %v893 = vunpack.c.l.b16 %v822
    %v894 = vunpack.c.l.b16 %v823
    %v895 = vunpack.c.l.b16 %v824
    %v896 = vunpack.c.l.b16 %v825
    %v897 = vunpack.c.l.b16 %v826
    %v898 = vunpack.c.l.b16 %v827
    %v899 = vunpack.c.l.b16 %v828
    %v900 = vunpack.c.l.b16 %v829
    %v901 = vunpack.c.l.b16 %v830
    %v902 = vunpack.c.l.b16 %v831
    %v903 = vunpack.c.l.b16 %v832
    %v904 = vunpack.c.l.b16 %v833
    %v905 = vunpack.c.l.b16 %v834
    %v906 = vunpack.c.l.b16 %v835
    %v907 = vunpack.c.l.b16 %v836
    %v908 = vunpack.c.l.b16 %v837
    %v909 = vunpack.c.l.b16 %v838
    %v910 = vunpack.c.l.b16 %v839
    %v911 = vunpack.c.l.b16 %v840
    %v912 = vunpack.c.l.b16 %v841
    %v913 = vunpack.c.l.b16 %v842
    %v914 = vpack.c.b16 %v883, %v882
    %v915 = vpack.c.b16 %v885, %v884
    %v916 = vpack.c.b16 %v887, %v886
    %v917 = vpack.c.b16 %v889, %v888
    %v918 = vpack.c.b16 %v891, %v890
    %v919 = vpack.c.b16 %v893, %v892
    %v920 = vpack.c.b16 %v895, %v894
    %v921 = vpack.c.b16 %v897, %v896
    %v922 = vpack.c.b16 %v899, %v898
    %v923 = vpack.c.b16 %v901, %v900
    %v924 = vpack.c.b16 %v903, %v902
    %v925 = vpack.c.b16 %v905, %v904
    %v926 = vpack.c.b16 %v907, %v906
    %v927 = vpack.c.b16 %v909, %v908
    %v928 = vpack.c.b16 %v911, %v910
    %v929 = vpack.c.b16 %v913, %v912
    %946 = vmatprep.subr.bf16.mxu0 0
    %947 = vmatpush1.bf16.msra.mxu0 %v914
    %948 = vmatprep.subr.bf16.mxu0 0
    %949 = vmatpush1.bf16.msra.mxu0 %v915
    %950 = vmatprep.subr.bf16.mxu0 0
    %951 = vmatpush1.bf16.msra.mxu0 %v916
    %952 = vmatprep.subr.bf16.mxu0 0
    %953 = vmatpush1.bf16.msra.mxu0 %v917
    %954 = vmatprep.subr.bf16.mxu0 0
    %955 = vmatpush1.bf16.msra.mxu0 %v918
    %956 = vmatprep.subr.bf16.mxu0 0
    %957 = vmatpush1.bf16.msra.mxu0 %v919
    %958 = vmatprep.subr.bf16.mxu0 0
    %959 = vmatpush1.bf16.msra.mxu0 %v920
    %960 = vmatprep.subr.bf16.mxu0 0
    %961 = vmatpush1.bf16.msra.mxu0 %v921
    %962 = vmatprep.subr.bf16.mxu0 0
    %963 = vmatpush1.bf16.msra.mxu0 %v922
    %964 = vmatprep.subr.bf16.mxu0 0
    %965 = vmatpush1.bf16.msra.mxu0 %v923
    %966 = vmatprep.subr.bf16.mxu0 0
    %967 = vmatpush1.bf16.msra.mxu0 %v924
    %968 = vmatprep.subr.bf16.mxu0 0
    %969 = vmatpush1.bf16.msra.mxu0 %v925
    %970 = vmatprep.subr.bf16.mxu0 0
    %971 = vmatpush1.bf16.msra.mxu0 %v926
    %972 = vmatprep.subr.bf16.mxu0 0
    %973 = vmatpush1.bf16.msra.mxu0 %v927
    %974 = vmatprep.subr.bf16.mxu0 0
    %975 = vmatpush1.bf16.msra.mxu0 %v928
    %976 = vmatprep.subr.bf16.mxu0 0
    %977 = vmatpush1.bf16.msra.mxu0 %v929
    %978 = vmatprep.mubr.bf16.mxu0 %v748
    %979 = vmatmul.mubr.bf16.gmra.mrb[0].mxu0 %v747
    %v980 = vpop.f32.mrb[0].mxu0
    %v981 = vadd.f32 %v848, %v980
    %v982 = vpop.f32.mrb[0].mxu0
    %v983 = vpop.f32.mrb[0].mxu0
    %v984 = vadd.f32 %v848, %v983
    %v985 = vpop.f32.mrb[0].mxu0
    %986 = vmatprep.mubr.bf16.mxu0 %v750
    %987 = vmatmul.mubr.bf16.gmra.mrb[0].mxu0 %v749
    %v988 = vpop.f32.mrb[0].mxu0
    %v989 = vadd.f32 %v848, %v988
    %v990 = vpop.f32.mrb[0].mxu0
    %v991 = vpop.f32.mrb[0].mxu0
    %v992 = vadd.f32 %v848, %v991
    %v993 = vpop.f32.mrb[0].mxu0
    %994 = vmatprep.mubr.bf16.mxu0 %v752
    %995 = vmatmul.mubr.bf16.gmra.mrb[0].mxu0 %v751
    %v996 = vpop.f32.mrb[0].mxu0
    %v997 = vadd.f32 %v848, %v996
    %v998 = vpop.f32.mrb[0].mxu0
    %v999 = vpop.f32.mrb[0].mxu0
    %v1000 = vadd.f32 %v848, %v999
    %v1001 = vpop.f32.mrb[0].mxu0
    %1002 = vmatprep.mubr.bf16.mxu0 %v754
    %1003 = vmatmul.mubr.bf16.gmra.mrb[0].mxu0 %v753
    %v1004 = vpop.f32.mrb[0].mxu0
    %v1005 = vadd.f32 %v848, %v1004
    %v1006 = vpop.f32.mrb[0].mxu0
    %v1007 = vpop.f32.mrb[0].mxu0
    %v1008 = vadd.f32 %v848, %v1007
    %v1009 = vpop.f32.mrb[0].mxu0
    %1010 = vmatprep.mubr.bf16.mxu0 %v756
    %1011 = vmatmul.mubr.bf16.gmra.mrb[0].mxu0 %v755
    %v1012 = vpop.f32.mrb[0].mxu0
    %v1013 = vadd.f32 %v848, %v1012
    %v1014 = vpop.f32.mrb[0].mxu0
    %v1015 = vpop.f32.mrb[0].mxu0
    %v1016 = vadd.f32 %v848, %v1015
    %v1017 = vpop.f32.mrb[0].mxu0
    %1018 = vmatprep.mubr.bf16.mxu0 %v758
    %1019 = vmatmul.mubr.bf16.gmra.mrb[0].mxu0 %v757
    %v1020 = vpop.f32.mrb[0].mxu0
    %v1021 = vadd.f32 %v848, %v1020
    %v1022 = vpop.f32.mrb[0].mxu0
    %v1023 = vpop.f32.mrb[0].mxu0
    %v1024 = vadd.f32 %v848, %v1023
    %v1025 = vpop.f32.mrb[0].mxu0
    %1026 = vmatprep.mubr.bf16.mxu0 %v760
    %1027 = vmatmul.mubr.bf16.gmra.mrb[0].mxu0 %v759
    %v1028 = vpop.f32.mrb[0].mxu0
    %v1029 = vadd.f32 %v848, %v1028
    %v1030 = vpop.f32.mrb[0].mxu0
    %v1031 = vpop.f32.mrb[0].mxu0
    %v1032 = vadd.f32 %v848, %v1031
    %v1033 = vpop.f32.mrb[0].mxu0
    %1034 = vmatprep.mubr.bf16.mxu0 %v762
    %1035 = vmatmul.mubr.bf16.gmra.mrb[0].mxu0 %v761
    %v1036 = vpop.f32.mrb[0].mxu0
    %v1037 = vadd.f32 %v848, %v1036
    %v1038 = vpop.f32.mrb[0].mxu0
    %v1039 = vpop.f32.mrb[0].mxu0
    %v1040 = vadd.f32 %v848, %v1039
    %v1041 = vpop.f32.mrb[0].mxu0
    %1042 = vmatprep.mubr.bf16.mxu0 %v764
    %1043 = vmatmul.mubr.bf16.gmra.mrb[0].mxu0 %v763
    %v1044 = vpop.f32.mrb[0].mxu0
    %v1045 = vadd.f32 %v848, %v1044
    %v1046 = vpop.f32.mrb[0].mxu0
    %v1047 = vpop.f32.mrb[0].mxu0
    %v1048 = vadd.f32 %v848, %v1047
    %v1049 = vpop.f32.mrb[0].mxu0
    %1050 = vmatprep.mubr.bf16.mxu0 %v766
    %1051 = vmatmul.mubr.bf16.gmra.mrb[0].mxu0 %v765
    %v1052 = vpop.f32.mrb[0].mxu0
    %v1053 = vadd.f32 %v848, %v1052
    %v1054 = vpop.f32.mrb[0].mxu0
    %v1055 = vpop.f32.mrb[0].mxu0
    %v1056 = vadd.f32 %v848, %v1055
    %v1057 = vpop.f32.mrb[0].mxu0
    %1058 = vmatprep.mubr.bf16.mxu0 %v768
    %1059 = vmatmul.mubr.bf16.gmra.mrb[0].mxu0 %v767
    %v1060 = vpop.f32.mrb[0].mxu0
    %v1061 = vadd.f32 %v848, %v1060
    %v1062 = vpop.f32.mrb[0].mxu0
    %v1063 = vpop.f32.mrb[0].mxu0
    %v1064 = vadd.f32 %v848, %v1063
    %v1065 = vpop.f32.mrb[0].mxu0
    %1066 = vmatprep.mubr.bf16.mxu0 %v770
    %1067 = vmatmul.mubr.bf16.gmra.mrb[0].mxu0 %v769
    %v1068 = vpop.f32.mrb[0].mxu0
    %v1069 = vadd.f32 %v848, %v1068
    %v1070 = vpop.f32.mrb[0].mxu0
    %v1071 = vpop.f32.mrb[0].mxu0
    %v1072 = vadd.f32 %v848, %v1071
    %v1073 = vpop.f32.mrb[0].mxu0
    %1074 = vmatprep.mubr.bf16.mxu0 %v772
    %1075 = vmatmul.mubr.bf16.gmra.mrb[0].mxu0 %v771
    %v1076 = vpop.f32.mrb[0].mxu0
    %v1077 = vadd.f32 %v848, %v1076
    %v1078 = vpop.f32.mrb[0].mxu0
    %v1079 = vpop.f32.mrb[0].mxu0
    %v1080 = vadd.f32 %v848, %v1079
    %v1081 = vpop.f32.mrb[0].mxu0
    %1082 = vmatprep.mubr.bf16.mxu0 %v774
    %1083 = vmatmul.mubr.bf16.gmra.mrb[0].mxu0 %v773
    %v1084 = vpop.f32.mrb[0].mxu0
    %v1085 = vadd.f32 %v848, %v1084
    %v1086 = vpop.f32.mrb[0].mxu0
    %v1087 = vpop.f32.mrb[0].mxu0
    %v1088 = vadd.f32 %v848, %v1087
    %v1089 = vpop.f32.mrb[0].mxu0
    %1090 = vmatprep.mubr.bf16.mxu0 %v776
    %1091 = vmatmul.mubr.bf16.gmra.mrb[0].mxu0 %v775
    %v1092 = vpop.f32.mrb[0].mxu0
    %v1093 = vadd.f32 %v848, %v1092
    %v1094 = vpop.f32.mrb[0].mxu0
    %v1095 = vpop.f32.mrb[0].mxu0
    %v1096 = vadd.f32 %v848, %v1095
    %v1097 = vpop.f32.mrb[0].mxu0
    %1098 = vmatprep.mubr.bf16.mxu0 %v778
    %1099 = vmatmul.mubr.bf16.gmra.mrb[0].mxu0 %v777
    %v1100 = vpop.f32.mrb[0].mxu0
    %v1101 = vadd.f32 %v848, %v1100
    %v1102 = vpop.f32.mrb[0].mxu0
    %v1103 = vpop.f32.mrb[0].mxu0
    %v1104 = vadd.f32 %v848, %v1103
    %v1105 = vpop.f32.mrb[0].mxu0
    %1106 = vmatprep.mubr.bf16.mxu0 %v780
    %1107 = vmatmul.mubr.bf16.gmra.mrb[0].mxu0 %v779
    %v1108 = vpop.f32.mrb[0].mxu0
    %v1109 = vadd.f32 %v848, %v1108
    %v1110 = vpop.f32.mrb[0].mxu0
    %v1111 = vpop.f32.mrb[0].mxu0
    %v1112 = vadd.f32 %v848, %v1111
    %v1113 = vpop.f32.mrb[0].mxu0
    %1114 = vmatprep.mubr.bf16.mxu0 %v782
    %1115 = vmatmul.mubr.bf16.gmra.mrb[0].mxu0 %v781
    %v1116 = vpop.f32.mrb[0].mxu0
    %v1117 = vadd.f32 %v848, %v1116
    %v1118 = vpop.f32.mrb[0].mxu0
    %v1119 = vpop.f32.mrb[0].mxu0
    %v1120 = vadd.f32 %v848, %v1119
    %v1121 = vpop.f32.mrb[0].mxu0
    %1122 = vmatprep.mubr.bf16.mxu0 %v784
    %1123 = vmatmul.mubr.bf16.gmra.mrb[0].mxu0 %v783
    %v1124 = vpop.f32.mrb[0].mxu0
    %v1125 = vadd.f32 %v848, %v1124
    %v1126 = vpop.f32.mrb[0].mxu0
    %v1127 = vpop.f32.mrb[0].mxu0
    %v1128 = vadd.f32 %v848, %v1127
    %v1129 = vpop.f32.mrb[0].mxu0
    %1130 = vmatprep.mubr.bf16.mxu0 %v786
    %1131 = vmatmul.mubr.bf16.gmra.mrb[0].mxu0 %v785
    %v1132 = vpop.f32.mrb[0].mxu0
    %v1133 = vadd.f32 %v848, %v1132
    %v1134 = vpop.f32.mrb[0].mxu0
    %v1135 = vpop.f32.mrb[0].mxu0
    %v1136 = vadd.f32 %v848, %v1135
    %v1137 = vpop.f32.mrb[0].mxu0
    %1138 = vmatprep.mubr.bf16.mxu0 %v788
    %1139 = vmatmul.mubr.bf16.gmra.mrb[0].mxu0 %v787
    %v1140 = vpop.f32.mrb[0].mxu0
    %v1141 = vadd.f32 %v848, %v1140
    %v1142 = vpop.f32.mrb[0].mxu0
    %v1143 = vpop.f32.mrb[0].mxu0
    %v1144 = vadd.f32 %v848, %v1143
    %v1145 = vpop.f32.mrb[0].mxu0
    %1146 = vmatprep.mubr.bf16.mxu0 %v790
    %1147 = vmatmul.mubr.bf16.gmra.mrb[0].mxu0 %v789
    %v1148 = vpop.f32.mrb[0].mxu0
    %v1149 = vadd.f32 %v848, %v1148
    %v1150 = vpop.f32.mrb[0].mxu0
    %v1151 = vpop.f32.mrb[0].mxu0
    %v1152 = vadd.f32 %v848, %v1151
    %v1153 = vpop.f32.mrb[0].mxu0
    %1154 = vmatprep.mubr.bf16.mxu0 %v792
    %1155 = vmatmul.mubr.bf16.gmra.mrb[0].mxu0 %v791
    %v1156 = vpop.f32.mrb[0].mxu0
    %v1157 = vadd.f32 %v848, %v1156
    %v1158 = vpop.f32.mrb[0].mxu0
    %v1159 = vpop.f32.mrb[0].mxu0
    %v1160 = vadd.f32 %v848, %v1159
    %v1161 = vpop.f32.mrb[0].mxu0
    %1162 = vmatprep.mubr.bf16.mxu0 %v794
    %1163 = vmatmul.mubr.bf16.gmra.mrb[0].mxu0 %v793
    %v1164 = vpop.f32.mrb[0].mxu0
    %v1165 = vadd.f32 %v848, %v1164
    %v1166 = vpop.f32.mrb[0].mxu0
    %v1167 = vpop.f32.mrb[0].mxu0
    %v1168 = vadd.f32 %v848, %v1167
    %v1169 = vpop.f32.mrb[0].mxu0
    %1170 = vmatprep.mubr.bf16.mxu0 %v796
    %1171 = vmatmul.mubr.bf16.gmra.mrb[0].mxu0 %v795
    %v1172 = vpop.f32.mrb[0].mxu0
    %v1173 = vadd.f32 %v848, %v1172
    %v1174 = vpop.f32.mrb[0].mxu0
    %v1175 = vpop.f32.mrb[0].mxu0
    %v1176 = vadd.f32 %v848, %v1175
    %v1177 = vpop.f32.mrb[0].mxu0
    %1178 = vmatprep.mubr.bf16.mxu0 %v798
    %1179 = vmatmul.mubr.bf16.gmra.mrb[0].mxu0 %v797
    %v1180 = vpop.f32.mrb[0].mxu0
    %v1181 = vadd.f32 %v848, %v1180
    %v1182 = vpop.f32.mrb[0].mxu0
    %v1183 = vpop.f32.mrb[0].mxu0
    %v1184 = vadd.f32 %v848, %v1183
    %v1185 = vpop.f32.mrb[0].mxu0
    %1186 = vmatprep.mubr.bf16.mxu0 %v800
    %1187 = vmatmul.mubr.bf16.gmra.mrb[0].mxu0 %v799
    %v1188 = vpop.f32.mrb[0].mxu0
    %v1189 = vadd.f32 %v848, %v1188
    %v1190 = vpop.f32.mrb[0].mxu0
    %v1191 = vpop.f32.mrb[0].mxu0
    %v1192 = vadd.f32 %v848, %v1191
    %v1193 = vpop.f32.mrb[0].mxu0
    %1194 = vmatprep.mubr.bf16.mxu0 %v802
    %1195 = vmatmul.mubr.bf16.gmra.mrb[0].mxu0 %v801
    %v1196 = vpop.f32.mrb[0].mxu0
    %v1197 = vadd.f32 %v848, %v1196
    %v1198 = vpop.f32.mrb[0].mxu0
    %v1199 = vpop.f32.mrb[0].mxu0
    %v1200 = vadd.f32 %v848, %v1199
    %v1201 = vpop.f32.mrb[0].mxu0
    %1202 = vmatprep.mubr.bf16.mxu0 %v804
    %1203 = vmatmul.mubr.bf16.gmra.mrb[0].mxu0 %v803
    %v1204 = vpop.f32.mrb[0].mxu0
    %v1205 = vadd.f32 %v848, %v1204
    %v1206 = vpop.f32.mrb[0].mxu0
    %v1207 = vpop.f32.mrb[0].mxu0
    %v1208 = vadd.f32 %v848, %v1207
    %v1209 = vpop.f32.mrb[0].mxu0
    %1210 = vmatprep.mubr.bf16.mxu0 %v806
    %1211 = vmatmul.mubr.bf16.gmra.mrb[0].mxu0 %v805
    %v1212 = vpop.f32.mrb[0].mxu0
    %v1213 = vadd.f32 %v848, %v1212
    %v1214 = vpop.f32.mrb[0].mxu0
    %v1215 = vpop.f32.mrb[0].mxu0
    %v1216 = vadd.f32 %v848, %v1215
    %v1217 = vpop.f32.mrb[0].mxu0
    %1218 = vmatprep.mubr.bf16.mxu0 %v808
    %1219 = vmatmul.mubr.bf16.gmra.mrb[0].mxu0 %v807
    %v1220 = vpop.f32.mrb[0].mxu0
    %v1221 = vadd.f32 %v848, %v1220
    %v1222 = vpop.f32.mrb[0].mxu0
    %v1223 = vpop.f32.mrb[0].mxu0
    %v1224 = vadd.f32 %v848, %v1223
    %v1225 = vpop.f32.mrb[0].mxu0
    %1226 = vmatprep.mubr.bf16.mxu0 %v810
    %1227 = vmatmul.mubr.bf16.gmra.mrb[0].mxu0 %v809
    %v1228 = vpop.f32.mrb[0].mxu0
    %v1229 = vadd.f32 %v848, %v1228
    %v1230 = vpop.f32.mrb[0].mxu0
    %v1231 = vpop.f32.mrb[0].mxu0
    %v1232 = vadd.f32 %v848, %v1231
    %v1233 = vpop.f32.mrb[0].mxu0
    %1234 = vdwg.mxu0
    %1235 = vmax.xlane.f32.xlu0 %v981
    %v1236 = vpop.xlane.xlu0 %1235
    %1237 = vmax.xlane.f32.xlu0 %v984
    %v1238 = vpop.xlane.xlu0 %1237
    %1239 = vmax.xlane.f32.xlu0 %v989
    %v1240 = vpop.xlane.xlu0 %1239
    %1241 = vmax.xlane.f32.xlu0 %v992
    %v1242 = vpop.xlane.xlu0 %1241
    %1243 = vmax.xlane.f32.xlu0 %v997
    %v1244 = vpop.xlane.xlu0 %1243
    %1245 = vmax.xlane.f32.xlu0 %v1000
    %v1246 = vpop.xlane.xlu0 %1245
    %1247 = vmax.xlane.f32.xlu0 %v1005
    %v1248 = vpop.xlane.xlu0 %1247
    %1249 = vmax.xlane.f32.xlu0 %v1008
    %v1250 = vpop.xlane.xlu0 %1249
    %1251 = vmax.xlane.f32.xlu0 %v1013
    %v1252 = vpop.xlane.xlu0 %1251
    %1253 = vmax.xlane.f32.xlu0 %v1016
    %v1254 = vpop.xlane.xlu0 %1253
    %1255 = vmax.xlane.f32.xlu0 %v1021
    %v1256 = vpop.xlane.xlu0 %1255
    %1257 = vmax.xlane.f32.xlu0 %v1024
    %v1258 = vpop.xlane.xlu0 %1257
    %1259 = vmax.xlane.f32.xlu0 %v1029
    %v1260 = vpop.xlane.xlu0 %1259
    %1261 = vmax.xlane.f32.xlu0 %v1032
    %v1262 = vpop.xlane.xlu0 %1261
    %1263 = vmax.xlane.f32.xlu0 %v1037
    %v1264 = vpop.xlane.xlu0 %1263
    %1265 = vmax.xlane.f32.xlu0 %v1040
    %v1266 = vpop.xlane.xlu0 %1265
    %1267 = vmax.xlane.f32.xlu0 %v1045
    %v1268 = vpop.xlane.xlu0 %1267
    %1269 = vmax.xlane.f32.xlu0 %v1048
    %v1270 = vpop.xlane.xlu0 %1269
    %1271 = vmax.xlane.f32.xlu0 %v1053
    %v1272 = vpop.xlane.xlu0 %1271
    %1273 = vmax.xlane.f32.xlu0 %v1056
    %v1274 = vpop.xlane.xlu0 %1273
    %1275 = vmax.xlane.f32.xlu0 %v1061
    %v1276 = vpop.xlane.xlu0 %1275
    %1277 = vmax.xlane.f32.xlu0 %v1064
    %v1278 = vpop.xlane.xlu0 %1277
    %1279 = vmax.xlane.f32.xlu0 %v1069
    %v1280 = vpop.xlane.xlu0 %1279
    %1281 = vmax.xlane.f32.xlu0 %v1072
    %v1282 = vpop.xlane.xlu0 %1281
    %1283 = vmax.xlane.f32.xlu0 %v1077
    %v1284 = vpop.xlane.xlu0 %1283
    %1285 = vmax.xlane.f32.xlu0 %v1080
    %v1286 = vpop.xlane.xlu0 %1285
    %1287 = vmax.xlane.f32.xlu0 %v1085
    %v1288 = vpop.xlane.xlu0 %1287
    %1289 = vmax.xlane.f32.xlu0 %v1088
    %v1290 = vpop.xlane.xlu0 %1289
    %1291 = vmax.xlane.f32.xlu0 %v1093
    %v1292 = vpop.xlane.xlu0 %1291
    %1293 = vmax.xlane.f32.xlu0 %v1096
    %v1294 = vpop.xlane.xlu0 %1293
    %1295 = vmax.xlane.f32.xlu0 %v1101
    %v1296 = vpop.xlane.xlu0 %1295
    %1297 = vmax.xlane.f32.xlu0 %v1104
    %v1298 = vpop.xlane.xlu0 %1297
    %1299 = vmax.xlane.f32.xlu0 %v1109
    %v1300 = vpop.xlane.xlu0 %1299
    %1301 = vmax.xlane.f32.xlu0 %v1112
    %v1302 = vpop.xlane.xlu0 %1301
    %1303 = vmax.xlane.f32.xlu0 %v1117
    %v1304 = vpop.xlane.xlu0 %1303
    %1305 = vmax.xlane.f32.xlu0 %v1120
    %v1306 = vpop.xlane.xlu0 %1305
    %1307 = vmax.xlane.f32.xlu0 %v1125
    %v1308 = vpop.xlane.xlu0 %1307
    %1309 = vmax.xlane.f32.xlu0 %v1128
    %v1310 = vpop.xlane.xlu0 %1309
    %1311 = vmax.xlane.f32.xlu0 %v1133
    %v1312 = vpop.xlane.xlu0 %1311
    %1313 = vmax.xlane.f32.xlu0 %v1136
    %v1314 = vpop.xlane.xlu0 %1313
    %1315 = vmax.xlane.f32.xlu0 %v1141
    %v1316 = vpop.xlane.xlu0 %1315
    %1317 = vmax.xlane.f32.xlu0 %v1144
    %v1318 = vpop.xlane.xlu0 %1317
    %1319 = vmax.xlane.f32.xlu0 %v1149
    %v1320 = vpop.xlane.xlu0 %1319
    %1321 = vmax.xlane.f32.xlu0 %v1152
    %v1322 = vpop.xlane.xlu0 %1321
    %1323 = vmax.xlane.f32.xlu0 %v1157
    %v1324 = vpop.xlane.xlu0 %1323
    %1325 = vmax.xlane.f32.xlu0 %v1160
    %v1326 = vpop.xlane.xlu0 %1325
    %1327 = vmax.xlane.f32.xlu0 %v1165
    %v1328 = vpop.xlane.xlu0 %1327
    %1329 = vmax.xlane.f32.xlu0 %v1168
    %v1330 = vpop.xlane.xlu0 %1329
    %1331 = vmax.xlane.f32.xlu0 %v1173
    %v1332 = vpop.xlane.xlu0 %1331
    %1333 = vmax.xlane.f32.xlu0 %v1176
    %v1334 = vpop.xlane.xlu0 %1333
    %1335 = vmax.xlane.f32.xlu0 %v1181
    %v1336 = vpop.xlane.xlu0 %1335
    %1337 = vmax.xlane.f32.xlu0 %v1184
    %v1338 = vpop.xlane.xlu0 %1337
    %1339 = vmax.xlane.f32.xlu0 %v1189
    %v1340 = vpop.xlane.xlu0 %1339
    %1341 = vmax.xlane.f32.xlu0 %v1192
    %v1342 = vpop.xlane.xlu0 %1341
    %1343 = vmax.xlane.f32.xlu0 %v1197
    %v1344 = vpop.xlane.xlu0 %1343
    %1345 = vmax.xlane.f32.xlu0 %v1200
    %v1346 = vpop.xlane.xlu0 %1345
    %1347 = vmax.xlane.f32.xlu0 %v1205
    %v1348 = vpop.xlane.xlu0 %1347
    %1349 = vmax.xlane.f32.xlu0 %v1208
    %v1350 = vpop.xlane.xlu0 %1349
    %1351 = vmax.xlane.f32.xlu0 %v1213
    %v1352 = vpop.xlane.xlu0 %1351
    %1353 = vmax.xlane.f32.xlu0 %v1216
    %v1354 = vpop.xlane.xlu0 %1353
    %1355 = vmax.xlane.f32.xlu0 %v1221
    %v1356 = vpop.xlane.xlu0 %1355
    %1357 = vmax.xlane.f32.xlu0 %v1224
    %v1358 = vpop.xlane.xlu0 %1357
    %1359 = vmax.xlane.f32.xlu0 %v1229
    %v1360 = vpop.xlane.xlu0 %1359
    %1361 = vmax.xlane.f32.xlu0 %v1232
    %v1362 = vpop.xlane.xlu0 %1361
    %v1363 = vsub.f32 %v981, %v1236
    %v1364 = vsub.f32 %v984, %v1238
    %v1365 = vsub.f32 %v989, %v1240
    %v1366 = vsub.f32 %v992, %v1242
    %v1367 = vsub.f32 %v997, %v1244
    %v1368 = vsub.f32 %v1000, %v1246
    %v1369 = vsub.f32 %v1005, %v1248
    %v1370 = vsub.f32 %v1008, %v1250
    %v1371 = vsub.f32 %v1013, %v1252
    %v1372 = vsub.f32 %v1016, %v1254
    %v1373 = vsub.f32 %v1021, %v1256
    %v1374 = vsub.f32 %v1024, %v1258
    %v1375 = vsub.f32 %v1029, %v1260
    %v1376 = vsub.f32 %v1032, %v1262
    %v1377 = vsub.f32 %v1037, %v1264
    %v1378 = vsub.f32 %v1040, %v1266
    %v1379 = vsub.f32 %v1045, %v1268
    %v1380 = vsub.f32 %v1048, %v1270
    %v1381 = vsub.f32 %v1053, %v1272
    %v1382 = vsub.f32 %v1056, %v1274
    %v1383 = vsub.f32 %v1061, %v1276
    %v1384 = vsub.f32 %v1064, %v1278
    %v1385 = vsub.f32 %v1069, %v1280
    %v1386 = vsub.f32 %v1072, %v1282
    %v1387 = vsub.f32 %v1077, %v1284
    %v1388 = vsub.f32 %v1080, %v1286
    %v1389 = vsub.f32 %v1085, %v1288
    %v1390 = vsub.f32 %v1088, %v1290
    %v1391 = vsub.f32 %v1093, %v1292
    %v1392 = vsub.f32 %v1096, %v1294
    %v1393 = vsub.f32 %v1101, %v1296
    %v1394 = vsub.f32 %v1104, %v1298
    %v1395 = vsub.f32 %v1109, %v1300
    %v1396 = vsub.f32 %v1112, %v1302
    %v1397 = vsub.f32 %v1117, %v1304
    %v1398 = vsub.f32 %v1120, %v1306
    %v1399 = vsub.f32 %v1125, %v1308
    %v1400 = vsub.f32 %v1128, %v1310
    %v1401 = vsub.f32 %v1133, %v1312
    %v1402 = vsub.f32 %v1136, %v1314
    %v1403 = vsub.f32 %v1141, %v1316
    %v1404 = vsub.f32 %v1144, %v1318
    %v1405 = vsub.f32 %v1149, %v1320
    %v1406 = vsub.f32 %v1152, %v1322
    %v1407 = vsub.f32 %v1157, %v1324
    %v1408 = vsub.f32 %v1160, %v1326
    %v1409 = vsub.f32 %v1165, %v1328
    %v1410 = vsub.f32 %v1168, %v1330
    %v1411 = vsub.f32 %v1173, %v1332
    %v1412 = vsub.f32 %v1176, %v1334
    %v1413 = vsub.f32 %v1181, %v1336
    %v1414 = vsub.f32 %v1184, %v1338
    %v1415 = vsub.f32 %v1189, %v1340
    %v1416 = vsub.f32 %v1192, %v1342
    %v1417 = vsub.f32 %v1197, %v1344
    %v1418 = vsub.f32 %v1200, %v1346
    %v1419 = vsub.f32 %v1205, %v1348
    %v1420 = vsub.f32 %v1208, %v1350
    %v1421 = vsub.f32 %v1213, %v1352
    %v1422 = vsub.f32 %v1216, %v1354
    %v1423 = vsub.f32 %v1221, %v1356
    %v1424 = vsub.f32 %v1224, %v1358
    %v1425 = vsub.f32 %v1229, %v1360
    %v1426 = vsub.f32 %v1232, %v1362
    %v1427 = vmul.f32 %v1363, 1.442695
    %v1428 = vpow.pop %v1427
    %v1429 = vmul.f32 %v1364, 1.442695
    %v1430 = vpow.pop %v1429
    %v1431 = vmul.f32 %v1365, 1.442695
    %v1432 = vpow.pop %v1431
    %v1433 = vmul.f32 %v1366, 1.442695
    %v1434 = vpow.pop %v1433
    %v1435 = vmul.f32 %v1367, 1.442695
    %v1436 = vpow.pop %v1435
    %v1437 = vmul.f32 %v1368, 1.442695
    %v1438 = vpow.pop %v1437
    %v1439 = vmul.f32 %v1369, 1.442695
    %v1440 = vpow.pop %v1439
    %v1441 = vmul.f32 %v1370, 1.442695
    %v1442 = vpow.pop %v1441
    %v1443 = vmul.f32 %v1371, 1.442695
    %v1444 = vpow.pop %v1443
    %v1445 = vmul.f32 %v1372, 1.442695
    %v1446 = vpow.pop %v1445
    %v1447 = vmul.f32 %v1373, 1.442695
    %v1448 = vpow.pop %v1447
    %v1449 = vmul.f32 %v1374, 1.442695
    %v1450 = vpow.pop %v1449
    %v1451 = vmul.f32 %v1375, 1.442695
    %v1452 = vpow.pop %v1451
    %v1453 = vmul.f32 %v1376, 1.442695
    %v1454 = vpow.pop %v1453
    %v1455 = vmul.f32 %v1377, 1.442695
    %v1456 = vpow.pop %v1455
    %v1457 = vmul.f32 %v1378, 1.442695
    %v1458 = vpow.pop %v1457
    %v1459 = vmul.f32 %v1379, 1.442695
    %v1460 = vpow.pop %v1459
    %v1461 = vmul.f32 %v1380, 1.442695
    %v1462 = vpow.pop %v1461
    %v1463 = vmul.f32 %v1381, 1.442695
    %v1464 = vpow.pop %v1463
    %v1465 = vmul.f32 %v1382, 1.442695
    %v1466 = vpow.pop %v1465
    %v1467 = vmul.f32 %v1383, 1.442695
    %v1468 = vpow.pop %v1467
    %v1469 = vmul.f32 %v1384, 1.442695
    %v1470 = vpow.pop %v1469
    %v1471 = vmul.f32 %v1385, 1.442695
    %v1472 = vpow.pop %v1471
    %v1473 = vmul.f32 %v1386, 1.442695
    %v1474 = vpow.pop %v1473
    %v1475 = vmul.f32 %v1387, 1.442695
    %v1476 = vpow.pop %v1475
    %v1477 = vmul.f32 %v1388, 1.442695
    %v1478 = vpow.pop %v1477
    %v1479 = vmul.f32 %v1389, 1.442695
    %v1480 = vpow.pop %v1479
    %v1481 = vmul.f32 %v1390, 1.442695
    %v1482 = vpow.pop %v1481
    %v1483 = vmul.f32 %v1391, 1.442695
    %v1484 = vpow.pop %v1483
    %v1485 = vmul.f32 %v1392, 1.442695
    %v1486 = vpow.pop %v1485
    %v1487 = vmul.f32 %v1393, 1.442695
    %v1488 = vpow.pop %v1487
    %v1489 = vmul.f32 %v1394, 1.442695
    %v1490 = vpow.pop %v1489
    %v1491 = vmul.f32 %v1395, 1.442695
    %v1492 = vpow.pop %v1491
    %v1493 = vmul.f32 %v1396, 1.442695
    %v1494 = vpow.pop %v1493
    %v1495 = vmul.f32 %v1397, 1.442695
    %v1496 = vpow.pop %v1495
    %v1497 = vmul.f32 %v1398, 1.442695
    %v1498 = vpow.pop %v1497
    %v1499 = vmul.f32 %v1399, 1.442695
    %v1500 = vpow.pop %v1499
    %v1501 = vmul.f32 %v1400, 1.442695
    %v1502 = vpow.pop %v1501
    %v1503 = vmul.f32 %v1401, 1.442695
    %v1504 = vpow.pop %v1503
    %v1505 = vmul.f32 %v1402, 1.442695
    %v1506 = vpow.pop %v1505
    %v1507 = vmul.f32 %v1403, 1.442695
    %v1508 = vpow.pop %v1507
    %v1509 = vmul.f32 %v1404, 1.442695
    %v1510 = vpow.pop %v1509
    %v1511 = vmul.f32 %v1405, 1.442695
    %v1512 = vpow.pop %v1511
    %v1513 = vmul.f32 %v1406, 1.442695
    %v1514 = vpow.pop %v1513
    %v1515 = vmul.f32 %v1407, 1.442695
    %v1516 = vpow.pop %v1515
    %v1517 = vmul.f32 %v1408, 1.442695
    %v1518 = vpow.pop %v1517
    %v1519 = vmul.f32 %v1409, 1.442695
    %v1520 = vpow.pop %v1519
    %v1521 = vmul.f32 %v1410, 1.442695
    %v1522 = vpow.pop %v1521
    %v1523 = vmul.f32 %v1411, 1.442695
    %v1524 = vpow.pop %v1523
    %v1525 = vmul.f32 %v1412, 1.442695
    %v1526 = vpow.pop %v1525
    %v1527 = vmul.f32 %v1413, 1.442695
    %v1528 = vpow.pop %v1527
    %v1529 = vmul.f32 %v1414, 1.442695
    %v1530 = vpow.pop %v1529
    %v1531 = vmul.f32 %v1415, 1.442695
    %v1532 = vpow.pop %v1531
    %v1533 = vmul.f32 %v1416, 1.442695
    %v1534 = vpow.pop %v1533
    %v1535 = vmul.f32 %v1417, 1.442695
    %v1536 = vpow.pop %v1535
    %v1537 = vmul.f32 %v1418, 1.442695
    %v1538 = vpow.pop %v1537
    %v1539 = vmul.f32 %v1419, 1.442695
    %v1540 = vpow.pop %v1539
    %v1541 = vmul.f32 %v1420, 1.442695
    %v1542 = vpow.pop %v1541
    %v1543 = vmul.f32 %v1421, 1.442695
    %v1544 = vpow.pop %v1543
    %v1545 = vmul.f32 %v1422, 1.442695
    %v1546 = vpow.pop %v1545
    %v1547 = vmul.f32 %v1423, 1.442695
    %v1548 = vpow.pop %v1547
    %v1549 = vmul.f32 %v1424, 1.442695
    %v1550 = vpow.pop %v1549
    %v1551 = vmul.f32 %v1425, 1.442695
    %v1552 = vpow.pop %v1551
    %v1553 = vmul.f32 %v1426, 1.442695
    %v1554 = vpow.pop %v1553
    %1555 = vadd.xlane.f32.xlu0 %v1428
    %v1556 = vpop.xlane.xlu0 %1555
    %1557 = vadd.xlane.f32.xlu0 %v1430
    %v1558 = vpop.xlane.xlu0 %1557
    %1559 = vadd.xlane.f32.xlu0 %v1432
    %v1560 = vpop.xlane.xlu0 %1559
    %1561 = vadd.xlane.f32.xlu0 %v1434
    %v1562 = vpop.xlane.xlu0 %1561
    %1563 = vadd.xlane.f32.xlu0 %v1436
    %v1564 = vpop.xlane.xlu0 %1563
    %1565 = vadd.xlane.f32.xlu0 %v1438
    %v1566 = vpop.xlane.xlu0 %1565
    %1567 = vadd.xlane.f32.xlu0 %v1440
    %v1568 = vpop.xlane.xlu0 %1567
    %1569 = vadd.xlane.f32.xlu0 %v1442
    %v1570 = vpop.xlane.xlu0 %1569
    %1571 = vadd.xlane.f32.xlu0 %v1444
    %v1572 = vpop.xlane.xlu0 %1571
    %1573 = vadd.xlane.f32.xlu0 %v1446
    %v1574 = vpop.xlane.xlu0 %1573
    %1575 = vadd.xlane.f32.xlu0 %v1448
    %v1576 = vpop.xlane.xlu0 %1575
    %1577 = vadd.xlane.f32.xlu0 %v1450
    %v1578 = vpop.xlane.xlu0 %1577
    %1579 = vadd.xlane.f32.xlu0 %v1452
    %v1580 = vpop.xlane.xlu0 %1579
    %1581 = vadd.xlane.f32.xlu0 %v1454
    %v1582 = vpop.xlane.xlu0 %1581
    %1583 = vadd.xlane.f32.xlu0 %v1456
    %v1584 = vpop.xlane.xlu0 %1583
    %1585 = vadd.xlane.f32.xlu0 %v1458
    %v1586 = vpop.xlane.xlu0 %1585
    %1587 = vadd.xlane.f32.xlu0 %v1460
    %v1588 = vpop.xlane.xlu0 %1587
    %1589 = vadd.xlane.f32.xlu0 %v1462
    %v1590 = vpop.xlane.xlu0 %1589
    %1591 = vadd.xlane.f32.xlu0 %v1464
    %v1592 = vpop.xlane.xlu0 %1591
    %1593 = vadd.xlane.f32.xlu0 %v1466
    %v1594 = vpop.xlane.xlu0 %1593
    %1595 = vadd.xlane.f32.xlu0 %v1468
    %v1596 = vpop.xlane.xlu0 %1595
    %1597 = vadd.xlane.f32.xlu0 %v1470
    %v1598 = vpop.xlane.xlu0 %1597
    %1599 = vadd.xlane.f32.xlu0 %v1472
    %v1600 = vpop.xlane.xlu0 %1599
    %1601 = vadd.xlane.f32.xlu0 %v1474
    %v1602 = vpop.xlane.xlu0 %1601
    %1603 = vadd.xlane.f32.xlu0 %v1476
    %v1604 = vpop.xlane.xlu0 %1603
    %1605 = vadd.xlane.f32.xlu0 %v1478
    %v1606 = vpop.xlane.xlu0 %1605
    %1607 = vadd.xlane.f32.xlu0 %v1480
    %v1608 = vpop.xlane.xlu0 %1607
    %1609 = vadd.xlane.f32.xlu0 %v1482
    %v1610 = vpop.xlane.xlu0 %1609
    %1611 = vadd.xlane.f32.xlu0 %v1484
    %v1612 = vpop.xlane.xlu0 %1611
    %1613 = vadd.xlane.f32.xlu0 %v1486
    %v1614 = vpop.xlane.xlu0 %1613
    %1615 = vadd.xlane.f32.xlu0 %v1488
    %v1616 = vpop.xlane.xlu0 %1615
    %1617 = vadd.xlane.f32.xlu0 %v1490
    %v1618 = vpop.xlane.xlu0 %1617
    %1619 = vadd.xlane.f32.xlu0 %v1492
    %v1620 = vpop.xlane.xlu0 %1619
    %1621 = vadd.xlane.f32.xlu0 %v1494
    %v1622 = vpop.xlane.xlu0 %1621
    %1623 = vadd.xlane.f32.xlu0 %v1496
    %v1624 = vpop.xlane.xlu0 %1623
    %1625 = vadd.xlane.f32.xlu0 %v1498
    %v1626 = vpop.xlane.xlu0 %1625
    %1627 = vadd.xlane.f32.xlu0 %v1500
    %v1628 = vpop.xlane.xlu0 %1627
    %1629 = vadd.xlane.f32.xlu0 %v1502
    %v1630 = vpop.xlane.xlu0 %1629
    %1631 = vadd.xlane.f32.xlu0 %v1504
    %v1632 = vpop.xlane.xlu0 %1631
    %1633 = vadd.xlane.f32.xlu0 %v1506
    %v1634 = vpop.xlane.xlu0 %1633
    %1635 = vadd.xlane.f32.xlu0 %v1508
    %v1636 = vpop.xlane.xlu0 %1635
    %1637 = vadd.xlane.f32.xlu0 %v1510
    %v1638 = vpop.xlane.xlu0 %1637
    %1639 = vadd.xlane.f32.xlu0 %v1512
    %v1640 = vpop.xlane.xlu0 %1639
    %1641 = vadd.xlane.f32.xlu0 %v1514
    %v1642 = vpop.xlane.xlu0 %1641
    %1643 = vadd.xlane.f32.xlu0 %v1516
    %v1644 = vpop.xlane.xlu0 %1643
    %1645 = vadd.xlane.f32.xlu0 %v1518
    %v1646 = vpop.xlane.xlu0 %1645
    %1647 = vadd.xlane.f32.xlu0 %v1520
    %v1648 = vpop.xlane.xlu0 %1647
    %1649 = vadd.xlane.f32.xlu0 %v1522
    %v1650 = vpop.xlane.xlu0 %1649
    %1651 = vadd.xlane.f32.xlu0 %v1524
    %v1652 = vpop.xlane.xlu0 %1651
    %1653 = vadd.xlane.f32.xlu0 %v1526
    %v1654 = vpop.xlane.xlu0 %1653
    %1655 = vadd.xlane.f32.xlu0 %v1528
    %v1656 = vpop.xlane.xlu0 %1655
    %1657 = vadd.xlane.f32.xlu0 %v1530
    %v1658 = vpop.xlane.xlu0 %1657
    %1659 = vadd.xlane.f32.xlu0 %v1532
    %v1660 = vpop.xlane.xlu0 %1659
    %1661 = vadd.xlane.f32.xlu0 %v1534
    %v1662 = vpop.xlane.xlu0 %1661
    %1663 = vadd.xlane.f32.xlu0 %v1536
    %v1664 = vpop.xlane.xlu0 %1663
    %1665 = vadd.xlane.f32.xlu0 %v1538
    %v1666 = vpop.xlane.xlu0 %1665
    %1667 = vadd.xlane.f32.xlu0 %v1540
    %v1668 = vpop.xlane.xlu0 %1667
    %1669 = vadd.xlane.f32.xlu0 %v1542
    %v1670 = vpop.xlane.xlu0 %1669
    %1671 = vadd.xlane.f32.xlu0 %v1544
    %v1672 = vpop.xlane.xlu0 %1671
    %1673 = vadd.xlane.f32.xlu0 %v1546
    %v1674 = vpop.xlane.xlu0 %1673
    %1675 = vadd.xlane.f32.xlu0 %v1548
    %v1676 = vpop.xlane.xlu0 %1675
    %1677 = vadd.xlane.f32.xlu0 %v1550
    %v1678 = vpop.xlane.xlu0 %1677
    %1679 = vadd.xlane.f32.xlu0 %v1552
    %v1680 = vpop.xlane.xlu0 %1679
    %1681 = vadd.xlane.f32.xlu0 %v1554
    %v1682 = vpop.xlane.xlu0 %1681
    %v1683 = vlog2.pop %v1556
    %v1684 = vmul.f32 %v1683, 0.6931472
    %v1685 = vlog2.pop %v1558
    %v1686 = vmul.f32 %v1685, 0.6931472
    %v1687 = vlog2.pop %v1560
    %v1688 = vmul.f32 %v1687, 0.6931472
    %v1689 = vlog2.pop %v1562
    %v1690 = vmul.f32 %v1689, 0.6931472
    %v1691 = vlog2.pop %v1564
    %v1692 = vmul.f32 %v1691, 0.6931472
    %v1693 = vlog2.pop %v1566
    %v1694 = vmul.f32 %v1693, 0.6931472
    %v1695 = vlog2.pop %v1568
    %v1696 = vmul.f32 %v1695, 0.6931472
    %v1697 = vlog2.pop %v1570
    %v1698 = vmul.f32 %v1697, 0.6931472
    %v1699 = vlog2.pop %v1572
    %v1700 = vmul.f32 %v1699, 0.6931472
    %v1701 = vlog2.pop %v1574
    %v1702 = vmul.f32 %v1701, 0.6931472
    %v1703 = vlog2.pop %v1576
    %v1704 = vmul.f32 %v1703, 0.6931472
    %v1705 = vlog2.pop %v1578
    %v1706 = vmul.f32 %v1705, 0.6931472
    %v1707 = vlog2.pop %v1580
    %v1708 = vmul.f32 %v1707, 0.6931472
    %v1709 = vlog2.pop %v1582
    %v1710 = vmul.f32 %v1709, 0.6931472
    %v1711 = vlog2.pop %v1584
    %v1712 = vmul.f32 %v1711, 0.6931472
    %v1713 = vlog2.pop %v1586
    %v1714 = vmul.f32 %v1713, 0.6931472
    %v1715 = vlog2.pop %v1588
    %v1716 = vmul.f32 %v1715, 0.6931472
    %v1717 = vlog2.pop %v1590
    %v1718 = vmul.f32 %v1717, 0.6931472
    %v1719 = vlog2.pop %v1592
    %v1720 = vmul.f32 %v1719, 0.6931472
    %v1721 = vlog2.pop %v1594
    %v1722 = vmul.f32 %v1721, 0.6931472
    %v1723 = vlog2.pop %v1596
    %v1724 = vmul.f32 %v1723, 0.6931472
    %v1725 = vlog2.pop %v1598
    %v1726 = vmul.f32 %v1725, 0.6931472
    %v1727 = vlog2.pop %v1600
    %v1728 = vmul.f32 %v1727, 0.6931472
    %v1729 = vlog2.pop %v1602
    %v1730 = vmul.f32 %v1729, 0.6931472
    %v1731 = vlog2.pop %v1604
    %v1732 = vmul.f32 %v1731, 0.6931472
    %v1733 = vlog2.pop %v1606
    %v1734 = vmul.f32 %v1733, 0.6931472
    %v1735 = vlog2.pop %v1608
    %v1736 = vmul.f32 %v1735, 0.6931472
    %v1737 = vlog2.pop %v1610
    %v1738 = vmul.f32 %v1737, 0.6931472
    %v1739 = vlog2.pop %v1612
    %v1740 = vmul.f32 %v1739, 0.6931472
    %v1741 = vlog2.pop %v1614
    %v1742 = vmul.f32 %v1741, 0.6931472
    %v1743 = vlog2.pop %v1616
    %v1744 = vmul.f32 %v1743, 0.6931472
    %v1745 = vlog2.pop %v1618
    %v1746 = vmul.f32 %v1745, 0.6931472
    %v1747 = vlog2.pop %v1620
    %v1748 = vmul.f32 %v1747, 0.6931472
    %v1749 = vlog2.pop %v1622
    %v1750 = vmul.f32 %v1749, 0.6931472
    %v1751 = vlog2.pop %v1624
    %v1752 = vmul.f32 %v1751, 0.6931472
    %v1753 = vlog2.pop %v1626
    %v1754 = vmul.f32 %v1753, 0.6931472
    %v1755 = vlog2.pop %v1628
    %v1756 = vmul.f32 %v1755, 0.6931472
    %v1757 = vlog2.pop %v1630
    %v1758 = vmul.f32 %v1757, 0.6931472
    %v1759 = vlog2.pop %v1632
    %v1760 = vmul.f32 %v1759, 0.6931472
    %v1761 = vlog2.pop %v1634
    %v1762 = vmul.f32 %v1761, 0.6931472
    %v1763 = vlog2.pop %v1636
    %v1764 = vmul.f32 %v1763, 0.6931472
    %v1765 = vlog2.pop %v1638
    %v1766 = vmul.f32 %v1765, 0.6931472
    %v1767 = vlog2.pop %v1640
    %v1768 = vmul.f32 %v1767, 0.6931472
    %v1769 = vlog2.pop %v1642
    %v1770 = vmul.f32 %v1769, 0.6931472
    %v1771 = vlog2.pop %v1644
    %v1772 = vmul.f32 %v1771, 0.6931472
    %v1773 = vlog2.pop %v1646
    %v1774 = vmul.f32 %v1773, 0.6931472
    %v1775 = vlog2.pop %v1648
    %v1776 = vmul.f32 %v1775, 0.6931472
    %v1777 = vlog2.pop %v1650
    %v1778 = vmul.f32 %v1777, 0.6931472
    %v1779 = vlog2.pop %v1652
    %v1780 = vmul.f32 %v1779, 0.6931472
    %v1781 = vlog2.pop %v1654
    %v1782 = vmul.f32 %v1781, 0.6931472
    %v1783 = vlog2.pop %v1656
    %v1784 = vmul.f32 %v1783, 0.6931472
    %v1785 = vlog2.pop %v1658
    %v1786 = vmul.f32 %v1785, 0.6931472
    %v1787 = vlog2.pop %v1660
    %v1788 = vmul.f32 %v1787, 0.6931472
    %v1789 = vlog2.pop %v1662
    %v1790 = vmul.f32 %v1789, 0.6931472
    %v1791 = vlog2.pop %v1664
    %v1792 = vmul.f32 %v1791, 0.6931472
    %v1793 = vlog2.pop %v1666
    %v1794 = vmul.f32 %v1793, 0.6931472
    %v1795 = vlog2.pop %v1668
    %v1796 = vmul.f32 %v1795, 0.6931472
    %v1797 = vlog2.pop %v1670
    %v1798 = vmul.f32 %v1797, 0.6931472
    %v1799 = vlog2.pop %v1672
    %v1800 = vmul.f32 %v1799, 0.6931472
    %v1801 = vlog2.pop %v1674
    %v1802 = vmul.f32 %v1801, 0.6931472
    %v1803 = vlog2.pop %v1676
    %v1804 = vmul.f32 %v1803, 0.6931472
    %v1805 = vlog2.pop %v1678
    %v1806 = vmul.f32 %v1805, 0.6931472
    %v1807 = vlog2.pop %v1680
    %v1808 = vmul.f32 %v1807, 0.6931472
    %v1809 = vlog2.pop %v1682
    %v1810 = vmul.f32 %v1809, 0.6931472
    %v1811 = vsub.f32 %v1363, %v1684
    %v1812 = vsub.f32 %v1364, %v1686
    %v1813 = vsub.f32 %v1365, %v1688
    %v1814 = vsub.f32 %v1366, %v1690
    %v1815 = vsub.f32 %v1367, %v1692
    %v1816 = vsub.f32 %v1368, %v1694
    %v1817 = vsub.f32 %v1369, %v1696
    %v1818 = vsub.f32 %v1370, %v1698
    %v1819 = vsub.f32 %v1371, %v1700
    %v1820 = vsub.f32 %v1372, %v1702
    %v1821 = vsub.f32 %v1373, %v1704
    %v1822 = vsub.f32 %v1374, %v1706
    %v1823 = vsub.f32 %v1375, %v1708
    %v1824 = vsub.f32 %v1376, %v1710
    %v1825 = vsub.f32 %v1377, %v1712
    %v1826 = vsub.f32 %v1378, %v1714
    %v1827 = vsub.f32 %v1379, %v1716
    %v1828 = vsub.f32 %v1380, %v1718
    %v1829 = vsub.f32 %v1381, %v1720
    %v1830 = vsub.f32 %v1382, %v1722
    %v1831 = vsub.f32 %v1383, %v1724
    %v1832 = vsub.f32 %v1384, %v1726
    %v1833 = vsub.f32 %v1385, %v1728
    %v1834 = vsub.f32 %v1386, %v1730
    %v1835 = vsub.f32 %v1387, %v1732
    %v1836 = vsub.f32 %v1388, %v1734
    %v1837 = vsub.f32 %v1389, %v1736
    %v1838 = vsub.f32 %v1390, %v1738
    %v1839 = vsub.f32 %v1391, %v1740
    %v1840 = vsub.f32 %v1392, %v1742
    %v1841 = vsub.f32 %v1393, %v1744
    %v1842 = vsub.f32 %v1394, %v1746
    %v1843 = vsub.f32 %v1395, %v1748
    %v1844 = vsub.f32 %v1396, %v1750
    %v1845 = vsub.f32 %v1397, %v1752
    %v1846 = vsub.f32 %v1398, %v1754
    %v1847 = vsub.f32 %v1399, %v1756
    %v1848 = vsub.f32 %v1400, %v1758
    %v1849 = vsub.f32 %v1401, %v1760
    %v1850 = vsub.f32 %v1402, %v1762
    %v1851 = vsub.f32 %v1403, %v1764
    %v1852 = vsub.f32 %v1404, %v1766
    %v1853 = vsub.f32 %v1405, %v1768
    %v1854 = vsub.f32 %v1406, %v1770
    %v1855 = vsub.f32 %v1407, %v1772
    %v1856 = vsub.f32 %v1408, %v1774
    %v1857 = vsub.f32 %v1409, %v1776
    %v1858 = vsub.f32 %v1410, %v1778
    %v1859 = vsub.f32 %v1411, %v1780
    %v1860 = vsub.f32 %v1412, %v1782
    %v1861 = vsub.f32 %v1413, %v1784
    %v1862 = vsub.f32 %v1414, %v1786
    %v1863 = vsub.f32 %v1415, %v1788
    %v1864 = vsub.f32 %v1416, %v1790
    %v1865 = vsub.f32 %v1417, %v1792
    %v1866 = vsub.f32 %v1418, %v1794
    %v1867 = vsub.f32 %v1419, %v1796
    %v1868 = vsub.f32 %v1420, %v1798
    %v1869 = vsub.f32 %v1421, %v1800
    %v1870 = vsub.f32 %v1422, %v1802
    %v1871 = vsub.f32 %v1423, %v1804
    %v1872 = vsub.f32 %v1424, %v1806
    %v1873 = vsub.f32 %v1425, %v1808
    %v1874 = vsub.f32 %v1426, %v1810
    %1875 = vst [vmem:[#allocation7] sm:$0xff] %v1811
    %1876 = vst [vmem:[#allocation7 + $0x8] sm:$0xff] %v1812
    %1877 = vst [vmem:[#allocation7 + $0x10] sm:$0xff] %v1813
    %1878 = vst [vmem:[#allocation7 + $0x18] sm:$0xff] %v1814
    %1879 = vst [vmem:[#allocation7 + $0x20] sm:$0xff] %v1815
    %1880 = vst [vmem:[#allocation7 + $0x28] sm:$0xff] %v1816
    %1881 = vst [vmem:[#allocation7 + $0x30] sm:$0xff] %v1817
    %1882 = vst [vmem:[#allocation7 + $0x38] sm:$0xff] %v1818
    %1883 = vst [vmem:[#allocation7 + $0x40] sm:$0xff] %v1819
    %1884 = vst [vmem:[#allocation7 + $0x48] sm:$0xff] %v1820
    %1885 = vst [vmem:[#allocation7 + $0x50] sm:$0xff] %v1821
    %1886 = vst [vmem:[#allocation7 + $0x58] sm:$0xff] %v1822
    %1887 = vst [vmem:[#allocation7 + $0x60] sm:$0xff] %v1823
    %1888 = vst [vmem:[#allocation7 + $0x68] sm:$0xff] %v1824
    %1889 = vst [vmem:[#allocation7 + $0x70] sm:$0xff] %v1825
    %1890 = vst [vmem:[#allocation7 + $0x78] sm:$0xff] %v1826
    %1891 = vst [vmem:[#allocation7 + $0x80] sm:$0xff] %v1827
    %1892 = vst [vmem:[#allocation7 + $0x88] sm:$0xff] %v1828
    %1893 = vst [vmem:[#allocation7 + $0x90] sm:$0xff] %v1829
    %1894 = vst [vmem:[#allocation7 + $0x98] sm:$0xff] %v1830
    %1895 = vst [vmem:[#allocation7 + $0xa0] sm:$0xff] %v1831
    %1896 = vst [vmem:[#allocation7 + $0xa8] sm:$0xff] %v1832
    %1897 = vst [vmem:[#allocation7 + $0xb0] sm:$0xff] %v1833
    %1898 = vst [vmem:[#allocation7 + $0xb8] sm:$0xff] %v1834
    %1899 = vst [vmem:[#allocation7 + $0xc0] sm:$0xff] %v1835
    %1900 = vst [vmem:[#allocation7 + $0xc8] sm:$0xff] %v1836
    %1901 = vst [vmem:[#allocation7 + $0xd0] sm:$0xff] %v1837
    %1902 = vst [vmem:[#allocation7 + $0xd8] sm:$0xff] %v1838
    %1903 = vst [vmem:[#allocation7 + $0xe0] sm:$0xff] %v1839
    %1904 = vst [vmem:[#allocation7 + $0xe8] sm:$0xff] %v1840
    %1905 = vst [vmem:[#allocation7 + $0xf0] sm:$0xff] %v1841
    %1906 = vst [vmem:[#allocation7 + $0xf8] sm:$0xff] %v1842
    %1907 = vst [vmem:[#allocation7 + $0x100] sm:$0xff] %v1843
    %1908 = vst [vmem:[#allocation7 + $0x108] sm:$0xff] %v1844
    %1909 = vst [vmem:[#allocation7 + $0x110] sm:$0xff] %v1845
    %1910 = vst [vmem:[#allocation7 + $0x118] sm:$0xff] %v1846
    %1911 = vst [vmem:[#allocation7 + $0x120] sm:$0xff] %v1847
    %1912 = vst [vmem:[#allocation7 + $0x128] sm:$0xff] %v1848
    %1913 = vst [vmem:[#allocation7 + $0x130] sm:$0xff] %v1849
    %1914 = vst [vmem:[#allocation7 + $0x138] sm:$0xff] %v1850
    %1915 = vst [vmem:[#allocation7 + $0x140] sm:$0xff] %v1851
    %1916 = vst [vmem:[#allocation7 + $0x148] sm:$0xff] %v1852
    %1917 = vst [vmem:[#allocation7 + $0x150] sm:$0xff] %v1853
    %1918 = vst [vmem:[#allocation7 + $0x158] sm:$0xff] %v1854
    %1919 = vst [vmem:[#allocation7 + $0x160] sm:$0xff] %v1855
    %1920 = vst [vmem:[#allocation7 + $0x168] sm:$0xff] %v1856
    %1921 = vst [vmem:[#allocation7 + $0x170] sm:$0xff] %v1857
    %1922 = vst [vmem:[#allocation7 + $0x178] sm:$0xff] %v1858
    %1923 = vst [vmem:[#allocation7 + $0x180] sm:$0xff] %v1859
    %1924 = vst [vmem:[#allocation7 + $0x188] sm:$0xff] %v1860
    %1925 = vst [vmem:[#allocation7 + $0x190] sm:$0xff] %v1861
    %1926 = vst [vmem:[#allocation7 + $0x198] sm:$0xff] %v1862
    %1927 = vst [vmem:[#allocation7 + $0x1a0] sm:$0xff] %v1863
    %1928 = vst [vmem:[#allocation7 + $0x1a8] sm:$0xff] %v1864
    %1929 = vst [vmem:[#allocation7 + $0x1b0] sm:$0xff] %v1865
    %1930 = vst [vmem:[#allocation7 + $0x1b8] sm:$0xff] %v1866
    %1931 = vst [vmem:[#allocation7 + $0x1c0] sm:$0xff] %v1867
    %1932 = vst [vmem:[#allocation7 + $0x1c8] sm:$0xff] %v1868
    %1933 = vst [vmem:[#allocation7 + $0x1d0] sm:$0xff] %v1869
    %1934 = vst [vmem:[#allocation7 + $0x1d8] sm:$0xff] %v1870
    %1935 = vst [vmem:[#allocation7 + $0x1e0] sm:$0xff] %v1871
    %1936 = vst [vmem:[#allocation7 + $0x1e8] sm:$0xff] %v1872
    %1937 = vst [vmem:[#allocation7 + $0x1f0] sm:$0xff] %v1873
    %1938 = vst [vmem:[#allocation7 + $0x1f8] sm:$0xff] %v1874
    // Predicated region
    $region34: #{_mlp_forward_impl.1} parent=1 // pred_check
      _
    $region35: #{_mlp_forward_impl.1} parent=1 // pred_check_branch
      %1940 = sbr.rel (0) target = $region37
    $region36: #{_mlp_forward_impl.1} parent=1 // pred_region
      // Predicated region
      $region38: #{_mlp_forward_impl.1} parent=36 // pred_check
        _
      $region39: #{_mlp_forward_impl.1} parent=36 // pred_check_branch
        %1942 = sbr.rel (0) target = $region41
      $region40: #{_mlp_forward_impl.1} parent=36 // pred_region
        // Predicated region
        $region42: #{_mlp_forward_impl.1} parent=40 // pred_check
          _
        $region43: #{_mlp_forward_impl.1} parent=40 // pred_check_branch
          %1944 = sbr.rel (0) target = $region45
        $region44: #{_mlp_forward_impl.1} parent=40 // pred_region
          // Predicated region
          $region57: #{_mlp_forward_impl.1} parent=44 // pred_check
            _
          $region58: #{_mlp_forward_impl.1} parent=44 // pred_check_branch
            %2083 = sbr.rel (0) target = $region60
          $region59: #{_mlp_forward_impl.1} parent=44 // pred_region
            loop: start=0, step=1, limit=1
            $region61: #{_mlp_forward_impl.1} parent=59 // loop_pre_header
              _
            $region62: #{_mlp_forward_impl.1} parent=59 // loop_header
              %s2085 = sphi 0, %s2089
              %p2086 = scmp.ge.s32.totalorder %s2085, 1
              %s2090 = sphi [#allocation7], [#allocation7]
              %s2091 = sphi %s5, %s5
            $region63: #{_mlp_forward_impl.1} parent=59 // loop_header_branch
              %2088 = sbr.rel (%p2086) target = $region67
            $region64: #{_mlp_forward_impl.1} parent=59 // loop_body
              %v2092 = vld [vmem:[%s2090] sm:$0xff]
              %2093 = vst [vmem:[%s2091] sm:$0xff] %v2092
              %v2094 = vld [vmem:[%s2090 + $0x8] sm:$0xff]
              %2095 = vst [vmem:[%s2091 + $0x8] sm:$0xff] %v2094
              %v2096 = vld [vmem:[%s2090 + $0x10] sm:$0xff]
              %2097 = vst [vmem:[%s2091 + $0x10] sm:$0xff] %v2096
              %v2098 = vld [vmem:[%s2090 + $0x18] sm:$0xff]
              %2099 = vst [vmem:[%s2091 + $0x18] sm:$0xff] %v2098
              %v2100 = vld [vmem:[%s2090 + $0x20] sm:$0xff]
              %2101 = vst [vmem:[%s2091 + $0x20] sm:$0xff] %v2100
              %v2102 = vld [vmem:[%s2090 + $0x28] sm:$0xff]
              %2103 = vst [vmem:[%s2091 + $0x28] sm:$0xff] %v2102
              %v2104 = vld [vmem:[%s2090 + $0x30] sm:$0xff]
              %2105 = vst [vmem:[%s2091 + $0x30] sm:$0xff] %v2104
              %v2106 = vld [vmem:[%s2090 + $0x38] sm:$0xff]
              %2107 = vst [vmem:[%s2091 + $0x38] sm:$0xff] %v2106
              %v2108 = vld [vmem:[%s2090 + $0x40] sm:$0xff]
              %2109 = vst [vmem:[%s2091 + $0x40] sm:$0xff] %v2108
              %v2110 = vld [vmem:[%s2090 + $0x48] sm:$0xff]
              %2111 = vst [vmem:[%s2091 + $0x48] sm:$0xff] %v2110
              %v2112 = vld [vmem:[%s2090 + $0x50] sm:$0xff]
              %2113 = vst [vmem:[%s2091 + $0x50] sm:$0xff] %v2112
              %v2114 = vld [vmem:[%s2090 + $0x58] sm:$0xff]
              %2115 = vst [vmem:[%s2091 + $0x58] sm:$0xff] %v2114
              %v2116 = vld [vmem:[%s2090 + $0x60] sm:$0xff]
              %2117 = vst [vmem:[%s2091 + $0x60] sm:$0xff] %v2116
              %v2118 = vld [vmem:[%s2090 + $0x68] sm:$0xff]
              %2119 = vst [vmem:[%s2091 + $0x68] sm:$0xff] %v2118
              %v2120 = vld [vmem:[%s2090 + $0x70] sm:$0xff]
              %2121 = vst [vmem:[%s2091 + $0x70] sm:$0xff] %v2120
              %v2122 = vld [vmem:[%s2090 + $0x78] sm:$0xff]
              %2123 = vst [vmem:[%s2091 + $0x78] sm:$0xff] %v2122
              %v2124 = vld [vmem:[%s2090 + $0x80] sm:$0xff]
              %2125 = vst [vmem:[%s2091 + $0x80] sm:$0xff] %v2124
              %v2126 = vld [vmem:[%s2090 + $0x88] sm:$0xff]
              %2127 = vst [vmem:[%s2091 + $0x88] sm:$0xff] %v2126
              %v2128 = vld [vmem:[%s2090 + $0x90] sm:$0xff]
              %2129 = vst [vmem:[%s2091 + $0x90] sm:$0xff] %v2128
              %v2130 = vld [vmem:[%s2090 + $0x98] sm:$0xff]
              %2131 = vst [vmem:[%s2091 + $0x98] sm:$0xff] %v2130
              %v2132 = vld [vmem:[%s2090 + $0xa0] sm:$0xff]
              %2133 = vst [vmem:[%s2091 + $0xa0] sm:$0xff] %v2132
              %v2134 = vld [vmem:[%s2090 + $0xa8] sm:$0xff]
              %2135 = vst [vmem:[%s2091 + $0xa8] sm:$0xff] %v2134
              %v2136 = vld [vmem:[%s2090 + $0xb0] sm:$0xff]
              %2137 = vst [vmem:[%s2091 + $0xb0] sm:$0xff] %v2136
              %v2138 = vld [vmem:[%s2090 + $0xb8] sm:$0xff]
              %2139 = vst [vmem:[%s2091 + $0xb8] sm:$0xff] %v2138
              %v2140 = vld [vmem:[%s2090 + $0xc0] sm:$0xff]
              %2141 = vst [vmem:[%s2091 + $0xc0] sm:$0xff] %v2140
              %v2142 = vld [vmem:[%s2090 + $0xc8] sm:$0xff]
              %2143 = vst [vmem:[%s2091 + $0xc8] sm:$0xff] %v2142
              %v2144 = vld [vmem:[%s2090 + $0xd0] sm:$0xff]
              %2145 = vst [vmem:[%s2091 + $0xd0] sm:$0xff] %v2144
              %v2146 = vld [vmem:[%s2090 + $0xd8] sm:$0xff]
              %2147 = vst [vmem:[%s2091 + $0xd8] sm:$0xff] %v2146
              %v2148 = vld [vmem:[%s2090 + $0xe0] sm:$0xff]
              %2149 = vst [vmem:[%s2091 + $0xe0] sm:$0xff] %v2148
              %v2150 = vld [vmem:[%s2090 + $0xe8] sm:$0xff]
              %2151 = vst [vmem:[%s2091 + $0xe8] sm:$0xff] %v2150
              %v2152 = vld [vmem:[%s2090 + $0xf0] sm:$0xff]
              %2153 = vst [vmem:[%s2091 + $0xf0] sm:$0xff] %v2152
              %v2154 = vld [vmem:[%s2090 + $0xf8] sm:$0xff]
              %2155 = vst [vmem:[%s2091 + $0xf8] sm:$0xff] %v2154
              %v2156 = vld [vmem:[%s2090 + $0x100] sm:$0xff]
              %2157 = vst [vmem:[%s2091 + $0x100] sm:$0xff] %v2156
              %v2158 = vld [vmem:[%s2090 + $0x108] sm:$0xff]
              %2159 = vst [vmem:[%s2091 + $0x108] sm:$0xff] %v2158
              %v2160 = vld [vmem:[%s2090 + $0x110] sm:$0xff]
              %2161 = vst [vmem:[%s2091 + $0x110] sm:$0xff] %v2160
              %v2162 = vld [vmem:[%s2090 + $0x118] sm:$0xff]
              %2163 = vst [vmem:[%s2091 + $0x118] sm:$0xff] %v2162
              %v2164 = vld [vmem:[%s2090 + $0x120] sm:$0xff]
              %2165 = vst [vmem:[%s2091 + $0x120] sm:$0xff] %v2164
              %v2166 = vld [vmem:[%s2090 + $0x128] sm:$0xff]
              %2167 = vst [vmem:[%s2091 + $0x128] sm:$0xff] %v2166
              %v2168 = vld [vmem:[%s2090 + $0x130] sm:$0xff]
              %2169 = vst [vmem:[%s2091 + $0x130] sm:$0xff] %v2168
              %v2170 = vld [vmem:[%s2090 + $0x138] sm:$0xff]
              %2171 = vst [vmem:[%s2091 + $0x138] sm:$0xff] %v2170
              %v2172 = vld [vmem:[%s2090 + $0x140] sm:$0xff]
              %2173 = vst [vmem:[%s2091 + $0x140] sm:$0xff] %v2172
              %v2174 = vld [vmem:[%s2090 + $0x148] sm:$0xff]
              %2175 = vst [vmem:[%s2091 + $0x148] sm:$0xff] %v2174
              %v2176 = vld [vmem:[%s2090 + $0x150] sm:$0xff]
              %2177 = vst [vmem:[%s2091 + $0x150] sm:$0xff] %v2176
              %v2178 = vld [vmem:[%s2090 + $0x158] sm:$0xff]
              %2179 = vst [vmem:[%s2091 + $0x158] sm:$0xff] %v2178
              %v2180 = vld [vmem:[%s2090 + $0x160] sm:$0xff]
              %2181 = vst [vmem:[%s2091 + $0x160] sm:$0xff] %v2180
              %v2182 = vld [vmem:[%s2090 + $0x168] sm:$0xff]
              %2183 = vst [vmem:[%s2091 + $0x168] sm:$0xff] %v2182
              %v2184 = vld [vmem:[%s2090 + $0x170] sm:$0xff]
              %2185 = vst [vmem:[%s2091 + $0x170] sm:$0xff] %v2184
              %v2186 = vld [vmem:[%s2090 + $0x178] sm:$0xff]
              %2187 = vst [vmem:[%s2091 + $0x178] sm:$0xff] %v2186
              %v2188 = vld [vmem:[%s2090 + $0x180] sm:$0xff]
              %2189 = vst [vmem:[%s2091 + $0x180] sm:$0xff] %v2188
              %v2190 = vld [vmem:[%s2090 + $0x188] sm:$0xff]
              %2191 = vst [vmem:[%s2091 + $0x188] sm:$0xff] %v2190
              %v2192 = vld [vmem:[%s2090 + $0x190] sm:$0xff]
              %2193 = vst [vmem:[%s2091 + $0x190] sm:$0xff] %v2192
              %v2194 = vld [vmem:[%s2090 + $0x198] sm:$0xff]
              %2195 = vst [vmem:[%s2091 + $0x198] sm:$0xff] %v2194
              %v2196 = vld [vmem:[%s2090 + $0x1a0] sm:$0xff]
              %2197 = vst [vmem:[%s2091 + $0x1a0] sm:$0xff] %v2196
              %v2198 = vld [vmem:[%s2090 + $0x1a8] sm:$0xff]
              %2199 = vst [vmem:[%s2091 + $0x1a8] sm:$0xff] %v2198
              %v2200 = vld [vmem:[%s2090 + $0x1b0] sm:$0xff]
              %2201 = vst [vmem:[%s2091 + $0x1b0] sm:$0xff] %v2200
              %v2202 = vld [vmem:[%s2090 + $0x1b8] sm:$0xff]
              %2203 = vst [vmem:[%s2091 + $0x1b8] sm:$0xff] %v2202
              %v2204 = vld [vmem:[%s2090 + $0x1c0] sm:$0xff]
              %2205 = vst [vmem:[%s2091 + $0x1c0] sm:$0xff] %v2204
              %v2206 = vld [vmem:[%s2090 + $0x1c8] sm:$0xff]
              %2207 = vst [vmem:[%s2091 + $0x1c8] sm:$0xff] %v2206
              %v2208 = vld [vmem:[%s2090 + $0x1d0] sm:$0xff]
              %2209 = vst [vmem:[%s2091 + $0x1d0] sm:$0xff] %v2208
              %v2210 = vld [vmem:[%s2090 + $0x1d8] sm:$0xff]
              %2211 = vst [vmem:[%s2091 + $0x1d8] sm:$0xff] %v2210
              %v2212 = vld [vmem:[%s2090 + $0x1e0] sm:$0xff]
              %2213 = vst [vmem:[%s2091 + $0x1e0] sm:$0xff] %v2212
              %v2214 = vld [vmem:[%s2090 + $0x1e8] sm:$0xff]
              %2215 = vst [vmem:[%s2091 + $0x1e8] sm:$0xff] %v2214
              %v2216 = vld [vmem:[%s2090 + $0x1f0] sm:$0xff]
              %2217 = vst [vmem:[%s2091 + $0x1f0] sm:$0xff] %v2216
            $region65: #{_mlp_forward_impl.1} parent=59 // loop_footer
              %s2089 = sadd.s32 1, %s2085
            $region66: #{_mlp_forward_impl.1} parent=59 // loop_footer_branch
              %2084 = sbr.rel target = $region62
            $region67: #{_mlp_forward_impl.1} parent=59 // loop_exit
              _
          $region60: #{_mlp_forward_impl.1} parent=44 // pred_fallthru
            _
          // Predicated region
          $region68: #{_mlp_forward_impl.1} parent=44 // pred_check
            _
          $region69: #{_mlp_forward_impl.1} parent=44 // pred_check_branch
            %2219 = sbr.rel target = $region71
          $region70: #{_mlp_forward_impl.1} parent=44 // pred_region
            _
          $region71: #{_mlp_forward_impl.1} parent=44 // pred_fallthru
            _
        $region45: #{_mlp_forward_impl.1} parent=40 // pred_fallthru
          _
        // Predicated region
        $region46: #{_mlp_forward_impl.1} parent=40 // pred_check
          _
        $region47: #{_mlp_forward_impl.1} parent=40 // pred_check_branch
          %1946 = sbr.rel target = $region49
        $region48: #{_mlp_forward_impl.1} parent=40 // pred_region
          loop: start=0, step=1, limit=1
          $region50: #{_mlp_forward_impl.1} parent=48 // loop_pre_header
            _
          $region51: #{_mlp_forward_impl.1} parent=48 // loop_header
            %s1949 = sphi 0, %s1953
            %p1950 = scmp.ge.s32.totalorder %s1949, 1
            %s1954 = sphi [#allocation7], [#allocation7]
            %s1955 = sphi %s5, %s5
          $region52: #{_mlp_forward_impl.1} parent=48 // loop_header_branch
            %1952 = sbr.rel (%p1950) target = $region56
          $region53: #{_mlp_forward_impl.1} parent=48 // loop_body
            %v1956 = vld [vmem:[%s1954] sm:$0xff]
            %1957 = vst [vmem:[%s1955] sm:$0xff] %v1956
            %v1958 = vld [vmem:[%s1954 + $0x8] sm:$0xff]
            %1959 = vst [vmem:[%s1955 + $0x8] sm:$0xff] %v1958
            %v1960 = vld [vmem:[%s1954 + $0x10] sm:$0xff]
            %1961 = vst [vmem:[%s1955 + $0x10] sm:$0xff] %v1960
            %v1962 = vld [vmem:[%s1954 + $0x18] sm:$0xff]
            %1963 = vst [vmem:[%s1955 + $0x18] sm:$0xff] %v1962
            %v1964 = vld [vmem:[%s1954 + $0x20] sm:$0xff]
            %1965 = vst [vmem:[%s1955 + $0x20] sm:$0xff] %v1964
            %v1966 = vld [vmem:[%s1954 + $0x28] sm:$0xff]
            %1967 = vst [vmem:[%s1955 + $0x28] sm:$0xff] %v1966
            %v1968 = vld [vmem:[%s1954 + $0x30] sm:$0xff]
            %1969 = vst [vmem:[%s1955 + $0x30] sm:$0xff] %v1968
            %v1970 = vld [vmem:[%s1954 + $0x38] sm:$0xff]
            %1971 = vst [vmem:[%s1955 + $0x38] sm:$0xff] %v1970
            %v1972 = vld [vmem:[%s1954 + $0x40] sm:$0xff]
            %1973 = vst [vmem:[%s1955 + $0x40] sm:$0xff] %v1972
            %v1974 = vld [vmem:[%s1954 + $0x48] sm:$0xff]
            %1975 = vst [vmem:[%s1955 + $0x48] sm:$0xff] %v1974
            %v1976 = vld [vmem:[%s1954 + $0x50] sm:$0xff]
            %1977 = vst [vmem:[%s1955 + $0x50] sm:$0xff] %v1976
            %v1978 = vld [vmem:[%s1954 + $0x58] sm:$0xff]
            %1979 = vst [vmem:[%s1955 + $0x58] sm:$0xff] %v1978
            %v1980 = vld [vmem:[%s1954 + $0x60] sm:$0xff]
            %1981 = vst [vmem:[%s1955 + $0x60] sm:$0xff] %v1980
            %v1982 = vld [vmem:[%s1954 + $0x68] sm:$0xff]
            %1983 = vst [vmem:[%s1955 + $0x68] sm:$0xff] %v1982
            %v1984 = vld [vmem:[%s1954 + $0x70] sm:$0xff]
            %1985 = vst [vmem:[%s1955 + $0x70] sm:$0xff] %v1984
            %v1986 = vld [vmem:[%s1954 + $0x78] sm:$0xff]
            %1987 = vst [vmem:[%s1955 + $0x78] sm:$0xff] %v1986
            %v1988 = vld [vmem:[%s1954 + $0x80] sm:$0xff]
            %1989 = vst [vmem:[%s1955 + $0x80] sm:$0xff] %v1988
            %v1990 = vld [vmem:[%s1954 + $0x88] sm:$0xff]
            %1991 = vst [vmem:[%s1955 + $0x88] sm:$0xff] %v1990
            %v1992 = vld [vmem:[%s1954 + $0x90] sm:$0xff]
            %1993 = vst [vmem:[%s1955 + $0x90] sm:$0xff] %v1992
            %v1994 = vld [vmem:[%s1954 + $0x98] sm:$0xff]
            %1995 = vst [vmem:[%s1955 + $0x98] sm:$0xff] %v1994
            %v1996 = vld [vmem:[%s1954 + $0xa0] sm:$0xff]
            %1997 = vst [vmem:[%s1955 + $0xa0] sm:$0xff] %v1996
            %v1998 = vld [vmem:[%s1954 + $0xa8] sm:$0xff]
            %1999 = vst [vmem:[%s1955 + $0xa8] sm:$0xff] %v1998
            %v2000 = vld [vmem:[%s1954 + $0xb0] sm:$0xff]
            %2001 = vst [vmem:[%s1955 + $0xb0] sm:$0xff] %v2000
            %v2002 = vld [vmem:[%s1954 + $0xb8] sm:$0xff]
            %2003 = vst [vmem:[%s1955 + $0xb8] sm:$0xff] %v2002
            %v2004 = vld [vmem:[%s1954 + $0xc0] sm:$0xff]
            %2005 = vst [vmem:[%s1955 + $0xc0] sm:$0xff] %v2004
            %v2006 = vld [vmem:[%s1954 + $0xc8] sm:$0xff]
            %2007 = vst [vmem:[%s1955 + $0xc8] sm:$0xff] %v2006
            %v2008 = vld [vmem:[%s1954 + $0xd0] sm:$0xff]
            %2009 = vst [vmem:[%s1955 + $0xd0] sm:$0xff] %v2008
            %v2010 = vld [vmem:[%s1954 + $0xd8] sm:$0xff]
            %2011 = vst [vmem:[%s1955 + $0xd8] sm:$0xff] %v2010
            %v2012 = vld [vmem:[%s1954 + $0xe0] sm:$0xff]
            %2013 = vst [vmem:[%s1955 + $0xe0] sm:$0xff] %v2012
            %v2014 = vld [vmem:[%s1954 + $0xe8] sm:$0xff]
            %2015 = vst [vmem:[%s1955 + $0xe8] sm:$0xff] %v2014
            %v2016 = vld [vmem:[%s1954 + $0xf0] sm:$0xff]
            %2017 = vst [vmem:[%s1955 + $0xf0] sm:$0xff] %v2016
            %v2018 = vld [vmem:[%s1954 + $0xf8] sm:$0xff]
            %2019 = vst [vmem:[%s1955 + $0xf8] sm:$0xff] %v2018
            %v2020 = vld [vmem:[%s1954 + $0x100] sm:$0xff]
            %2021 = vst [vmem:[%s1955 + $0x100] sm:$0xff] %v2020
            %v2022 = vld [vmem:[%s1954 + $0x108] sm:$0xff]
            %2023 = vst [vmem:[%s1955 + $0x108] sm:$0xff] %v2022
            %v2024 = vld [vmem:[%s1954 + $0x110] sm:$0xff]
            %2025 = vst [vmem:[%s1955 + $0x110] sm:$0xff] %v2024
            %v2026 = vld [vmem:[%s1954 + $0x118] sm:$0xff]
            %2027 = vst [vmem:[%s1955 + $0x118] sm:$0xff] %v2026
            %v2028 = vld [vmem:[%s1954 + $0x120] sm:$0xff]
            %2029 = vst [vmem:[%s1955 + $0x120] sm:$0xff] %v2028
            %v2030 = vld [vmem:[%s1954 + $0x128] sm:$0xff]
            %2031 = vst [vmem:[%s1955 + $0x128] sm:$0xff] %v2030
            %v2032 = vld [vmem:[%s1954 + $0x130] sm:$0xff]
            %2033 = vst [vmem:[%s1955 + $0x130] sm:$0xff] %v2032
            %v2034 = vld [vmem:[%s1954 + $0x138] sm:$0xff]
            %2035 = vst [vmem:[%s1955 + $0x138] sm:$0xff] %v2034
            %v2036 = vld [vmem:[%s1954 + $0x140] sm:$0xff]
            %2037 = vst [vmem:[%s1955 + $0x140] sm:$0xff] %v2036
            %v2038 = vld [vmem:[%s1954 + $0x148] sm:$0xff]
            %2039 = vst [vmem:[%s1955 + $0x148] sm:$0xff] %v2038
            %v2040 = vld [vmem:[%s1954 + $0x150] sm:$0xff]
            %2041 = vst [vmem:[%s1955 + $0x150] sm:$0xff] %v2040
            %v2042 = vld [vmem:[%s1954 + $0x158] sm:$0xff]
            %2043 = vst [vmem:[%s1955 + $0x158] sm:$0xff] %v2042
            %v2044 = vld [vmem:[%s1954 + $0x160] sm:$0xff]
            %2045 = vst [vmem:[%s1955 + $0x160] sm:$0xff] %v2044
            %v2046 = vld [vmem:[%s1954 + $0x168] sm:$0xff]
            %2047 = vst [vmem:[%s1955 + $0x168] sm:$0xff] %v2046
            %v2048 = vld [vmem:[%s1954 + $0x170] sm:$0xff]
            %2049 = vst [vmem:[%s1955 + $0x170] sm:$0xff] %v2048
            %v2050 = vld [vmem:[%s1954 + $0x178] sm:$0xff]
            %2051 = vst [vmem:[%s1955 + $0x178] sm:$0xff] %v2050
            %v2052 = vld [vmem:[%s1954 + $0x180] sm:$0xff]
            %2053 = vst [vmem:[%s1955 + $0x180] sm:$0xff] %v2052
            %v2054 = vld [vmem:[%s1954 + $0x188] sm:$0xff]
            %2055 = vst [vmem:[%s1955 + $0x188] sm:$0xff] %v2054
            %v2056 = vld [vmem:[%s1954 + $0x190] sm:$0xff]
            %2057 = vst [vmem:[%s1955 + $0x190] sm:$0xff] %v2056
            %v2058 = vld [vmem:[%s1954 + $0x198] sm:$0xff]
            %2059 = vst [vmem:[%s1955 + $0x198] sm:$0xff] %v2058
            %v2060 = vld [vmem:[%s1954 + $0x1a0] sm:$0xff]
            %2061 = vst [vmem:[%s1955 + $0x1a0] sm:$0xff] %v2060
            %v2062 = vld [vmem:[%s1954 + $0x1a8] sm:$0xff]
            %2063 = vst [vmem:[%s1955 + $0x1a8] sm:$0xff] %v2062
            %v2064 = vld [vmem:[%s1954 + $0x1b0] sm:$0xff]
            %2065 = vst [vmem:[%s1955 + $0x1b0] sm:$0xff] %v2064
            %v2066 = vld [vmem:[%s1954 + $0x1b8] sm:$0xff]
            %2067 = vst [vmem:[%s1955 + $0x1b8] sm:$0xff] %v2066
            %v2068 = vld [vmem:[%s1954 + $0x1c0] sm:$0xff]
            %2069 = vst [vmem:[%s1955 + $0x1c0] sm:$0xff] %v2068
            %v2070 = vld [vmem:[%s1954 + $0x1c8] sm:$0xff]
            %2071 = vst [vmem:[%s1955 + $0x1c8] sm:$0xff] %v2070
            %v2072 = vld [vmem:[%s1954 + $0x1d0] sm:$0xff]
            %2073 = vst [vmem:[%s1955 + $0x1d0] sm:$0xff] %v2072
            %v2074 = vld [vmem:[%s1954 + $0x1d8] sm:$0xff]
            %2075 = vst [vmem:[%s1955 + $0x1d8] sm:$0xff] %v2074
            %v2076 = vld [vmem:[%s1954 + $0x1e0] sm:$0xff]
            %2077 = vst [vmem:[%s1955 + $0x1e0] sm:$0xff] %v2076
            %v2078 = vld [vmem:[%s1954 + $0x1e8] sm:$0xff]
            %2079 = vst [vmem:[%s1955 + $0x1e8] sm:$0xff] %v2078
            %v2080 = vld [vmem:[%s1954 + $0x1f0] sm:$0xff]
            %2081 = vst [vmem:[%s1955 + $0x1f0] sm:$0xff] %v2080
          $region54: #{_mlp_forward_impl.1} parent=48 // loop_footer
            %s1953 = sadd.s32 1, %s1949
          $region55: #{_mlp_forward_impl.1} parent=48 // loop_footer_branch
            %1948 = sbr.rel target = $region51
          $region56: #{_mlp_forward_impl.1} parent=48 // loop_exit
            _
        $region49: #{_mlp_forward_impl.1} parent=40 // pred_fallthru
          _
      $region41: #{_mlp_forward_impl.1} parent=36 // pred_fallthru
        _
      %2220 = vnop
    $region37: #{_mlp_forward_impl.1} parent=1 // pred_fallthru
      _
    // Predicated region
    $region72: #{_mlp_forward_impl.1} parent=1 // pred_check
      _
    $region73: #{_mlp_forward_impl.1} parent=1 // pred_check_branch
      %2222 = sbr.rel (0) target = $region75
    $region74: #{_mlp_forward_impl.1} parent=1 // pred_region
      _
    $region75: #{_mlp_forward_impl.1} parent=1 // pred_fallthru
      _
    %2223 = vsyncpa [#allocation3], 1
    %2224 = vsyncpa [#allocation5], 1

</llo_original>
